<compile_context>
chip_gen: v6e
topology: v6e:2x2x1
jax: 0.10.0
libtpu: 0.0.40
codegen_flags: <defaults>
</compile_context>

<pallas_src>
import jax
import jax.numpy as jnp
from jax.experimental import pallas as pl
from jax.experimental.pallas import tpu as pltpu

LANE = 128
_VMEM_LIMIT = 32 * 1024 * 1024   # safe on v5e/v6e/v7x
_FUSED_MAX_N = 512               # padded-N threshold for the single-call path


def _round_up(v, m):
    return -(-v // m) * m


# ----------------------------- Pallas kernels -----------------------------

def rgcn_layer_kernel(x_k_ref, x_i_ref, a_ref, w01_ref, wr_ref, b_ref,
                      out_ref, acc_ref, hk_ref):
    """One RGCN layer (2 relations) + bias + ReLU, K-tiled aggregation.

    grid = (i: output row tiles [parallel], k: contraction tiles [arbitrary])
    out[i] = relu( x[i] @ Wroot + b
                   + sum_k A0[i,k] @ (x[k] @ W0) + A1[i,k] @ (x[k] @ W1) )
    """
    k = pl.program_id(1)
    nk = pl.num_programs(1)
    hp = wr_ref.shape[1]

    # Init accumulator with root transform + bias (moves one MXU dot off the
    # heaviest epilogue step and removes the zero-fill store).
    @pl.when(k == 0)
    def _():
        acc_ref[...] = (jnp.dot(x_i_ref[...], wr_ref[...],
                                preferred_element_type=jnp.float32)
                        + b_ref[...])

    # Fused per-relation transform: one wide dot [tile, F] @ [F, 2H],
    # staged in an explicit bf16 VMEM scratch.
    hk_ref[...] = jnp.dot(x_k_ref[...], w01_ref[...],
                          preferred_element_type=jnp.float32
                          ).astype(jnp.bfloat16)

    # Single fused accumulator update (one RMW instead of two).
    acc_ref[...] += (jnp.dot(a_ref[0], hk_ref[:, :hp],
                             preferred_element_type=jnp.float32)
                     + jnp.dot(a_ref[1], hk_ref[:, hp:],
                               preferred_element_type=jnp.float32))

    @pl.when(k == nk - 1)
    def _():
        out_ref[...] = jnp.maximum(acc_ref[...], 0.0).astype(out_ref.dtype)


def pool_lin_kernel(p_ref, h_ref, wlin_ref, blin_ref, out_ref, pool_ref):
    """global_mean_pool (P @ h) + final Linear, K-tiled over node tiles."""
    k = pl.program_id(0)
    nk = pl.num_programs(0)

    @pl.when(k == 0)
    def _():
        pool_ref[...] = jnp.zeros_like(pool_ref)

    pool_ref[...] += jnp.dot(p_ref[...], h_ref[...],
                             preferred_element_type=jnp.float32)

    @pl.when(k == nk - 1)
    def _():
        out_ref[...] = (jnp.dot(pool_ref[...], wlin_ref[...],
                                preferred_element_type=jnp.float32)
                        + blin_ref[...])


def fused_small_kernel(x_ref, a_ref, p_ref,
                       w011_ref, wr1_ref, b1_ref,
                       w012_ref, wr2_ref, b2_ref,
                       w013_ref, wr3_ref, b3_ref,
                       wlin_ref, blin_ref, out_ref):
    """Whole network in one call for small graphs (padded N <= 512):
    3x (RGCN + ReLU) + global_mean_pool + Linear, everything resident in VMEM.
    """
    a0 = a_ref[0]
    a1 = a_ref[1]
    h = x_ref[...]
    for w01_ref, wr_ref, b_ref in ((w011_ref, wr1_ref, b1_ref),
                                   (w012_ref, wr2_ref, b2_ref),
                                   (w013_ref, wr3_ref, b3_ref)):
        hp = wr_ref.shape[1]
        hk = jnp.dot(h, w01_ref[...],
                     preferred_element_type=jnp.float32).astype(jnp.bfloat16)
        agg = (jnp.dot(a0, hk[:, :hp], preferred_element_type=jnp.float32)
               + jnp.dot(a1, hk[:, hp:], preferred_element_type=jnp.float32)
               + jnp.dot(h, wr_ref[...], preferred_element_type=jnp.float32)
               + b_ref[...])
        h = jnp.maximum(agg, 0.0).astype(jnp.bfloat16)
    pooled = jnp.dot(p_ref[...], h, preferred_element_type=jnp.float32)
    out_ref[...] = (jnp.dot(pooled, wlin_ref[...],
                            preferred_element_type=jnp.float32)
                    + blin_ref[...])


# ----------------------------- kernel wrappers -----------------------------

def rgcn_layer(x, a, w01, wr, b, tile):
    np_, fp = x.shape
    hp = wr.shape[1]
    ni = np_ // tile
    nk = np_ // tile
    flops = (2 * ni * np_ * fp * 2 * hp      # fused transform (recomputed / i)
             + 4 * np_ * np_ * hp            # aggregation dots
             + 2 * np_ * fp * hp)            # root transform
    bytes_accessed = (2 * np_ * np_ * 2                      # A (bf16)
                      + (ni + 1) * np_ * fp * 2              # x (k + i reads)
                      + np_ * hp * 2                         # out
                      + (w01.size + wr.size) * 2 + b.size * 4)
    return pl.pallas_call(
        rgcn_layer_kernel,
        out_shape=jax.ShapeDtypeStruct((np_, hp), jnp.bfloat16),
        grid_spec=pltpu.PrefetchScalarGridSpec(
            num_scalar_prefetch=0,
            grid=(ni, nk),
            in_specs=[
                pl.BlockSpec((tile, fp), lambda i, k: (k, 0)),     # x, K rows
                pl.BlockSpec((tile, fp), lambda i, k: (i, 0)),     # x, root rows
                pl.BlockSpec((2, tile, tile), lambda i, k: (0, i, k),
                             pipeline_mode=pl.Buffered(3)),        # A0|A1 stack
                pl.BlockSpec((fp, 2 * hp), lambda i, k: (0, 0)),   # [W0 | W1]
                pl.BlockSpec((fp, hp), lambda i, k: (0, 0)),       # Wroot
                pl.BlockSpec((1, hp), lambda i, k: (0, 0)),        # bias
            ],
            out_specs=pl.BlockSpec((tile, hp), lambda i, k: (i, 0)),
            scratch_shapes=[pltpu.VMEM((tile, hp), jnp.float32),
                            pltpu.VMEM((tile, 2 * hp), jnp.bfloat16)],
        ),
        compiler_params=pltpu.CompilerParams(
            dimension_semantics=("parallel", "arbitrary"),
            vmem_limit_bytes=_VMEM_LIMIT),
        cost_estimate=pl.CostEstimate(flops=flops, transcendentals=0,
                                      bytes_accessed=bytes_accessed),
    )(x, x, a, w01, wr, b)


def pool_linear(h, pool_mat, wlin_t, blin, tile):
    np_, hp = h.shape
    gp = pool_mat.shape[0]
    cp = wlin_t.shape[1]
    nk = np_ // tile
    return pl.pallas_call(
        pool_lin_kernel,
        out_shape=jax.ShapeDtypeStruct((gp, cp), jnp.float32),
        grid_spec=pltpu.PrefetchScalarGridSpec(
            num_scalar_prefetch=0,
            grid=(nk,),
            in_specs=[
                pl.BlockSpec((gp, tile), lambda k: (0, k)),   # pool matrix
                pl.BlockSpec((tile, hp), lambda k: (k, 0)),   # h
                pl.BlockSpec((hp, cp), lambda k: (0, 0)),     # lin W.T
                pl.BlockSpec((1, cp), lambda k: (0, 0)),      # lin bias
            ],
            out_specs=pl.BlockSpec((gp, cp), lambda k: (0, 0)),
            scratch_shapes=[pltpu.VMEM((gp, hp), jnp.float32)],
        ),
        compiler_params=pltpu.CompilerParams(
            dimension_semantics=("arbitrary",),
            vmem_limit_bytes=_VMEM_LIMIT),
    )(pool_mat, h, wlin_t, blin)


def ba_gcn_fused_small(xp, a, pool_mat, packed):
    gp = pool_mat.shape[0]
    cp = packed["Cp"]
    return pl.pallas_call(
        fused_small_kernel,
        out_shape=jax.ShapeDtypeStruct((gp, cp), jnp.float32),
        compiler_params=pltpu.CompilerParams(vmem_limit_bytes=_VMEM_LIMIT),
    )(xp, a, pool_mat,
      packed["l1_w01"], packed["l1_wr"], packed["l1_b"],
      packed["l2_w01"], packed["l2_wr"], packed["l2_b"],
      packed["l3_w01"], packed["l3_wr"], packed["l3_b"],
      packed["lin_wt"], packed["lin_b"])


# ----------------------------- glue (plain JAX) ----------------------------

def build_graph_operators(edge_index, edge_type, batch, num_nodes, np_, gp,
                          num_relations=2):
    """Dense row-normalized adjacencies (stacked, padded, bf16) and the
    global_mean_pool matrix — built directly at padded shape with a single
    scatter + normalize + one bf16 cast. Hoist this when the graph is static.
    """
    src = edge_index[0]
    dst = edge_index[1]
    a = jnp.zeros((num_relations, np_, np_), jnp.float32)
    a = a.at[edge_type, dst, src].add(1.0)                  # message j -> i
    deg = a.sum(axis=2, keepdims=True)                      # per-relation in-deg
    a = (a / jnp.maximum(deg, 1.0)).astype(jnp.bfloat16)    # mean aggregation

    pool = jnp.zeros((gp, np_), jnp.float32)
    pool = pool.at[batch, jnp.arange(num_nodes)].add(1.0)
    counts = pool.sum(axis=1, keepdims=True)
    pool = (pool / jnp.maximum(counts, 1.0)).astype(jnp.bfloat16)
    return a, pool


def init_params(key, num_node_features, hidden_channels, num_classes,
                num_relations=2):
    """Deterministic synthetic parameters (shapes match PyG RGCNConv/Linear)."""
    def glorot(k, shape):
        fan_in, fan_out = shape[-2], shape[-1]
        lim = (6.0 / (fan_in + fan_out)) ** 0.5
        return jax.random.uniform(k, shape, jnp.float32, -lim, lim)

    keys = jax.random.split(key, 12)
    p = {}
    dims = [(num_node_features, hidden_channels),
            (hidden_channels, hidden_channels),
            (hidden_channels, hidden_channels)]
    ki = 0
    for li, (fin, fout) in enumerate(dims, start=1):
        p[f"conv{li}_w"] = glorot(keys[ki], (num_relations, fin, fout)); ki += 1
        p[f"conv{li}_root"] = glorot(keys[ki], (fin, fout)); ki += 1
        p[f"conv{li}_b"] = jnp.zeros((fout,), jnp.float32)
    p["lin_w"] = glorot(keys[ki], (num_classes, hidden_channels)); ki += 1
    p["lin_b"] = jnp.zeros((num_classes,), jnp.float32)
    return p


def pack_params(params, num_node_features, hidden_channels, num_classes):
    """One-time padding / fusion: W0|W1 concatenated to [Fpad, 2*Hpad] bf16,
    lin_w transposed, all lane dims padded to 128 (lane-dense stores)."""
    h = hidden_channels
    hp = _round_up(h, LANE)
    cp = _round_up(num_classes, LANE)
    packed = {"Hp": hp, "Cp": cp, "C": num_classes}
    fins = [num_node_features, hidden_channels, hidden_channels]
    for li, fin in enumerate(fins, start=1):
        fp = _round_up(fin, LANE)
        w = params[f"conv{li}_w"]        # [2, fin, h]
        wr = params[f"conv{li}_root"]    # [fin, h]
        b = params[f"conv{li}_b"]        # [h]
        w01 = jnp.zeros((fp, 2 * hp), jnp.float32)
        w01 = w01.at[:fin, :h].set(w[0]).at[:fin, hp:hp + h].set(w[1])
        wrp = jnp.zeros((fp, hp), jnp.float32).at[:fin, :h].set(wr)
        bp = jnp.zeros((1, hp), jnp.float32).at[0, :h].set(b)
        packed[f"l{li}_w01"] = w01.astype(jnp.bfloat16)
        packed[f"l{li}_wr"] = wrp.astype(jnp.bfloat16)
        packed[f"l{li}_b"] = bp
    wlin_t = jnp.zeros((hp, cp), jnp.float32)
    wlin_t = wlin_t.at[:h, :num_classes].set(params["lin_w"].T)
    blin = jnp.zeros((1, cp), jnp.float32)
    blin = blin.at[0, :num_classes].set(params["lin_b"])
    packed["lin_wt"] = wlin_t
    packed["lin_b"] = blin
    return packed


def ba_gcn_forward(packed, x, edge_index, edge_attr, batch, num_graphs):
    n, f = x.shape
    hp, cp, num_classes = packed["Hp"], packed["Cp"], packed["C"]

    # Padding is 128-granular (decoupled from tile) to avoid inflating the
    # dominant O(N^2) adjacency traffic.
    np_ = _round_up(n, LANE)
    fp = _round_up(f, LANE)
    gp = _round_up(max(num_graphs, 8), 8)

    a, pool_mat = build_graph_operators(edge_index, edge_attr, batch, n,
                                        np_, gp)
    xp = jnp.zeros((np_, fp), jnp.bfloat16).at[:n, :f].set(
        x.astype(jnp.bfloat16))

    if np_ <= _FUSED_MAX_N:
        # Whole working set fits in VMEM: one launch, no HBM round-trips of h.
        logits = ba_gcn_fused_small(xp, a, pool_mat, packed)
    else:
        # Largest tile in {512, 256, 128} that divides padded N.
        tile = next(t for t in (512, 256, 128) if np_ % t == 0)
        h = xp
        for li in (1, 2, 3):
            h = rgcn_layer(h, a, packed[f"l{li}_w01"], packed[f"l{li}_wr"],
                           packed[f"l{li}_b"], tile)
        logits = pool_linear(h, pool_mat, packed["lin_wt"], packed["lin_b"],
                             tile)
    return logits[:num_graphs, :num_classes]


# ----------------------------- main ----------------------------------------

if __name__ == "__main__":
    key = jax.random.PRNGKey(0)
    (k_param, k_x, k_src, k_dst, k_rel,
     k_x2, k_src2, k_dst2, k_rel2) = jax.random.split(key, 9)

    num_node_features = 8
    hidden_channels = 32
    num_classes = 4

    params = init_params(k_param, num_node_features, hidden_channels,
                         num_classes)
    packed = pack_params(params, num_node_features, hidden_channels,
                         num_classes)

    # --- small graph: exercises the fully-fused single-call path ------------
    n1, e1, g1 = 16, 40, 2
    x1 = jax.random.normal(k_x, (n1, num_node_features), jnp.float32)
    edge_index1 = jnp.stack(
        [jax.random.randint(k_src, (e1,), 0, n1, jnp.int32),
         jax.random.randint(k_dst, (e1,), 0, n1, jnp.int32)], axis=0)
    edge_attr1 = jax.random.randint(k_rel, (e1,), 0, 2, jnp.int32)
    batch1 = jnp.concatenate([jnp.zeros((n1 // 2,), jnp.int32),
                              jnp.ones((n1 - n1 // 2,), jnp.int32)])
    out1 = jax.block_until_ready(
        ba_gcn_forward(packed, x1, edge_index1, edge_attr1, batch1, g1))
    assert out1.shape == (g1, num_classes)

    # --- larger graph: exercises the tiled layer + pool/linear kernels ------
    n2, e2, g2 = 1000, 5000, 3          # padded N = 1024 -> tile = 512
    x2 = jax.random.normal(k_x2, (n2, num_node_features), jnp.float32)
    edge_index2 = jnp.stack(
        [jax.random.randint(k_src2, (e2,), 0, n2, jnp.int32),
         jax.random.randint(k_dst2, (e2,), 0, n2, jnp.int32)], axis=0)
    edge_attr2 = jax.random.randint(k_rel2, (e2,), 0, 2, jnp.int32)
    batch2 = (jnp.arange(n2, dtype=jnp.int32) * g2) // n2
    out2 = jax.block_until_ready(
        ba_gcn_forward(packed, x2, edge_index2, edge_attr2, batch2, g2))
    assert out2.shape == (g2, num_classes)

    print("KERNEL_OK")
</pallas_src>

<mosaic_0001>
module attributes {stable_mosaic.version = 11 : i64} {
  func.func @fused_small_kernel(%arg0: memref<128x128xbf16, #tpu.memory_space<vmem>>, %arg1: memref<2x128x128xbf16, #tpu.memory_space<vmem>>, %arg2: memref<8x128xbf16, #tpu.memory_space<vmem>>, %arg3: memref<128x256xbf16, #tpu.memory_space<vmem>>, %arg4: memref<128x128xbf16, #tpu.memory_space<vmem>>, %arg5: memref<1x128xf32, #tpu.memory_space<vmem>>, %arg6: memref<128x256xbf16, #tpu.memory_space<vmem>>, %arg7: memref<128x128xbf16, #tpu.memory_space<vmem>>, %arg8: memref<1x128xf32, #tpu.memory_space<vmem>>, %arg9: memref<128x256xbf16, #tpu.memory_space<vmem>>, %arg10: memref<128x128xbf16, #tpu.memory_space<vmem>>, %arg11: memref<1x128xf32, #tpu.memory_space<vmem>>, %arg12: memref<128x128xf32, #tpu.memory_space<vmem>>, %arg13: memref<1x128xf32, #tpu.memory_space<vmem>>, %arg14: memref<8x128xf32, #tpu.memory_space<vmem>>) attributes {dimension_semantics = [], scalar_prefetch = 0 : i64, scratch_operands = 0 : i64, tpu.core_type = #tpu.core_type<tc>} {
    %c0 = arith.constant 0 : index
    %c0_0 = arith.constant 0 : index
    %c0_1 = arith.constant 0 : index
    %0 = vector.load %arg1[%c0, %c0_0, %c0_1] : memref<2x128x128xbf16, #tpu.memory_space<vmem>>, vector<1x128x128xbf16>
    %1 = vector.shape_cast %0 : vector<1x128x128xbf16> to vector<128x128xbf16>
    %c1 = arith.constant 1 : index
    %c0_2 = arith.constant 0 : index
    %c0_3 = arith.constant 0 : index
    %2 = vector.load %arg1[%c1, %c0_2, %c0_3] : memref<2x128x128xbf16, #tpu.memory_space<vmem>>, vector<1x128x128xbf16>
    %3 = vector.shape_cast %2 : vector<1x128x128xbf16> to vector<128x128xbf16>
    %c0_4 = arith.constant 0 : index
    %c0_5 = arith.constant 0 : index
    %4 = vector.load %arg0[%c0_4, %c0_5] : memref<128x128xbf16, #tpu.memory_space<vmem>>, vector<128x128xbf16>
    %c0_6 = arith.constant 0 : index
    %c0_7 = arith.constant 0 : index
    %5 = vector.load %arg3[%c0_6, %c0_7] : memref<128x256xbf16, #tpu.memory_space<vmem>>, vector<128x256xbf16>
    %cst = arith.constant dense<0.000000e+00> : vector<128x256xf32>
    %6 = tpu.matmul %4, %5, %cst {dimension_numbers = #tpu.dot_dimension_numbers<[1], [0], [0], [1], [0, 0, 1, 1], [], []>} : vector<128x128xbf16>, vector<128x256xbf16>, vector<128x256xf32> -> vector<128x256xf32>
    %7 = arith.truncf %6 : vector<128x256xf32> to vector<128x256xbf16>
    %8 = vector.extract_strided_slice %7 {offsets = [0, 0], sizes = [128, 128], strides = [1, 1]} : vector<128x256xbf16> to vector<128x128xbf16>
    %cst_8 = arith.constant dense<0.000000e+00> : vector<128x128xf32>
    %9 = tpu.matmul %1, %8, %cst_8 {dimension_numbers = #tpu.dot_dimension_numbers<[1], [0], [0], [1], [0, 0, 1, 1], [], []>} : vector<128x128xbf16>, vector<128x128xbf16>, vector<128x128xf32> -> vector<128x128xf32>
    %10 = vector.extract_strided_slice %7 {offsets = [0, 128], sizes = [128, 128], strides = [1, 1]} : vector<128x256xbf16> to vector<128x128xbf16>
    %cst_9 = arith.constant dense<0.000000e+00> : vector<128x128xf32>
    %11 = tpu.matmul %3, %10, %cst_9 {dimension_numbers = #tpu.dot_dimension_numbers<[1], [0], [0], [1], [0, 0, 1, 1], [], []>} : vector<128x128xbf16>, vector<128x128xbf16>, vector<128x128xf32> -> vector<128x128xf32>
    %12 = arith.addf %9, %11 : vector<128x128xf32>
    %c0_10 = arith.constant 0 : index
    %c0_11 = arith.constant 0 : index
    %13 = vector.load %arg4[%c0_10, %c0_11] : memref<128x128xbf16, #tpu.memory_space<vmem>>, vector<128x128xbf16>
    %cst_12 = arith.constant dense<0.000000e+00> : vector<128x128xf32>
    %14 = tpu.matmul %4, %13, %cst_12 {dimension_numbers = #tpu.dot_dimension_numbers<[1], [0], [0], [1], [0, 0, 1, 1], [], []>} : vector<128x128xbf16>, vector<128x128xbf16>, vector<128x128xf32> -> vector<128x128xf32>
    %15 = arith.addf %12, %14 : vector<128x128xf32>
    %c0_13 = arith.constant 0 : index
    %c0_14 = arith.constant 0 : index
    %16 = vector.load %arg5[%c0_13, %c0_14] : memref<1x128xf32, #tpu.memory_space<vmem>>, vector<1x128xf32>
    %17 = vector.broadcast %16 : vector<1x128xf32> to vector<128x128xf32>
    %18 = arith.addf %15, %17 : vector<128x128xf32>
    %cst_15 = arith.constant 0.000000e+00 : f32
    %19 = vector.broadcast %cst_15 : f32 to vector<128x128xf32>
    %20 = arith.maximumf %18, %19 : vector<128x128xf32>
    %21 = arith.truncf %20 : vector<128x128xf32> to vector<128x128xbf16>
    %c0_16 = arith.constant 0 : index
    %c0_17 = arith.constant 0 : index
    %22 = vector.load %arg6[%c0_16, %c0_17] : memref<128x256xbf16, #tpu.memory_space<vmem>>, vector<128x256xbf16>
    %cst_18 = arith.constant dense<0.000000e+00> : vector<128x256xf32>
    %23 = tpu.matmul %21, %22, %cst_18 {dimension_numbers = #tpu.dot_dimension_numbers<[1], [0], [0], [1], [0, 0, 1, 1], [], []>} : vector<128x128xbf16>, vector<128x256xbf16>, vector<128x256xf32> -> vector<128x256xf32>
    %24 = arith.truncf %23 : vector<128x256xf32> to vector<128x256xbf16>
    %25 = vector.extract_strided_slice %24 {offsets = [0, 0], sizes = [128, 128], strides = [1, 1]} : vector<128x256xbf16> to vector<128x128xbf16>
    %cst_19 = arith.constant dense<0.000000e+00> : vector<128x128xf32>
    %26 = tpu.matmul %1, %25, %cst_19 {dimension_numbers = #tpu.dot_dimension_numbers<[1], [0], [0], [1], [0, 0, 1, 1], [], []>} : vector<128x128xbf16>, vector<128x128xbf16>, vector<128x128xf32> -> vector<128x128xf32>
    %27 = vector.extract_strided_slice %24 {offsets = [0, 128], sizes = [128, 128], strides = [1, 1]} : vector<128x256xbf16> to vector<128x128xbf16>
    %cst_20 = arith.constant dense<0.000000e+00> : vector<128x128xf32>
    %28 = tpu.matmul %3, %27, %cst_20 {dimension_numbers = #tpu.dot_dimension_numbers<[1], [0], [0], [1], [0, 0, 1, 1], [], []>} : vector<128x128xbf16>, vector<128x128xbf16>, vector<128x128xf32> -> vector<128x128xf32>
    %29 = arith.addf %26, %28 : vector<128x128xf32>
    %c0_21 = arith.constant 0 : index
    %c0_22 = arith.constant 0 : index
    %30 = vector.load %arg7[%c0_21, %c0_22] : memref<128x128xbf16, #tpu.memory_space<vmem>>, vector<128x128xbf16>
    %cst_23 = arith.constant dense<0.000000e+00> : vector<128x128xf32>
    %31 = tpu.matmul %21, %30, %cst_23 {dimension_numbers = #tpu.dot_dimension_numbers<[1], [0], [0], [1], [0, 0, 1, 1], [], []>} : vector<128x128xbf16>, vector<128x128xbf16>, vector<128x128xf32> -> vector<128x128xf32>
    %32 = arith.addf %29, %31 : vector<128x128xf32>
    %c0_24 = arith.constant 0 : index
    %c0_25 = arith.constant 0 : index
    %33 = vector.load %arg8[%c0_24, %c0_25] : memref<1x128xf32, #tpu.memory_space<vmem>>, vector<1x128xf32>
    %34 = vector.broadcast %33 : vector<1x128xf32> to vector<128x128xf32>
    %35 = arith.addf %32, %34 : vector<128x128xf32>
    %cst_26 = arith.constant 0.000000e+00 : f32
    %36 = vector.broadcast %cst_26 : f32 to vector<128x128xf32>
    %37 = arith.maximumf %35, %36 : vector<128x128xf32>
    %38 = arith.truncf %37 : vector<128x128xf32> to vector<128x128xbf16>
    %c0_27 = arith.constant 0 : index
    %c0_28 = arith.constant 0 : index
    %39 = vector.load %arg9[%c0_27, %c0_28] : memref<128x256xbf16, #tpu.memory_space<vmem>>, vector<128x256xbf16>
    %cst_29 = arith.constant dense<0.000000e+00> : vector<128x256xf32>
    %40 = tpu.matmul %38, %39, %cst_29 {dimension_numbers = #tpu.dot_dimension_numbers<[1], [0], [0], [1], [0, 0, 1, 1], [], []>} : vector<128x128xbf16>, vector<128x256xbf16>, vector<128x256xf32> -> vector<128x256xf32>
    %41 = arith.truncf %40 : vector<128x256xf32> to vector<128x256xbf16>
    %42 = vector.extract_strided_slice %41 {offsets = [0, 0], sizes = [128, 128], strides = [1, 1]} : vector<128x256xbf16> to vector<128x128xbf16>
    %cst_30 = arith.constant dense<0.000000e+00> : vector<128x128xf32>
    %43 = tpu.matmul %1, %42, %cst_30 {dimension_numbers = #tpu.dot_dimension_numbers<[1], [0], [0], [1], [0, 0, 1, 1], [], []>} : vector<128x128xbf16>, vector<128x128xbf16>, vector<128x128xf32> -> vector<128x128xf32>
    %44 = vector.extract_strided_slice %41 {offsets = [0, 128], sizes = [128, 128], strides = [1, 1]} : vector<128x256xbf16> to vector<128x128xbf16>
    %cst_31 = arith.constant dense<0.000000e+00> : vector<128x128xf32>
    %45 = tpu.matmul %3, %44, %cst_31 {dimension_numbers = #tpu.dot_dimension_numbers<[1], [0], [0], [1], [0, 0, 1, 1], [], []>} : vector<128x128xbf16>, vector<128x128xbf16>, vector<128x128xf32> -> vector<128x128xf32>
    %46 = arith.addf %43, %45 : vector<128x128xf32>
    %c0_32 = arith.constant 0 : index
    %c0_33 = arith.constant 0 : index
    %47 = vector.load %arg10[%c0_32, %c0_33] : memref<128x128xbf16, #tpu.memory_space<vmem>>, vector<128x128xbf16>
    %cst_34 = arith.constant dense<0.000000e+00> : vector<128x128xf32>
    %48 = tpu.matmul %38, %47, %cst_34 {dimension_numbers = #tpu.dot_dimension_numbers<[1], [0], [0], [1], [0, 0, 1, 1], [], []>} : vector<128x128xbf16>, vector<128x128xbf16>, vector<128x128xf32> -> vector<128x128xf32>
    %49 = arith.addf %46, %48 : vector<128x128xf32>
    %c0_35 = arith.constant 0 : index
    %c0_36 = arith.constant 0 : index
    %50 = vector.load %arg11[%c0_35, %c0_36] : memref<1x128xf32, #tpu.memory_space<vmem>>, vector<1x128xf32>
    %51 = vector.broadcast %50 : vector<1x128xf32> to vector<128x128xf32>
    %52 = arith.addf %49, %51 : vector<128x128xf32>
    %cst_37 = arith.constant 0.000000e+00 : f32
    %53 = vector.broadcast %cst_37 : f32 to vector<128x128xf32>
    %54 = arith.maximumf %52, %53 : vector<128x128xf32>
    %55 = arith.truncf %54 : vector<128x128xf32> to vector<128x128xbf16>
    %c0_38 = arith.constant 0 : index
    %c0_39 = arith.constant 0 : index
    %56 = vector.load %arg2[%c0_38, %c0_39] : memref<8x128xbf16, #tpu.memory_space<vmem>>, vector<8x128xbf16>
    %cst_40 = arith.constant dense<0.000000e+00> : vector<8x128xf32>
    %57 = tpu.matmul %56, %55, %cst_40 {dimension_numbers = #tpu.dot_dimension_numbers<[1], [0], [0], [1], [0, 0, 1, 1], [], []>} : vector<8x128xbf16>, vector<128x128xbf16>, vector<8x128xf32> -> vector<8x128xf32>
    %c0_41 = arith.constant 0 : index
    %c0_42 = arith.constant 0 : index
    %58 = vector.load %arg12[%c0_41, %c0_42] : memref<128x128xf32, #tpu.memory_space<vmem>>, vector<128x128xf32>
    %cst_43 = arith.constant dense<0.000000e+00> : vector<8x128xf32>
    %59 = tpu.matmul %57, %58, %cst_43 {dimension_numbers = #tpu.dot_dimension_numbers<[1], [0], [0], [1], [0, 0, 1, 1], [], []>} : vector<8x128xf32>, vector<128x128xf32>, vector<8x128xf32> -> vector<8x128xf32>
    %c0_44 = arith.constant 0 : index
    %c0_45 = arith.constant 0 : index
    %60 = vector.load %arg13[%c0_44, %c0_45] : memref<1x128xf32, #tpu.memory_space<vmem>>, vector<1x128xf32>
    %61 = vector.broadcast %60 : vector<1x128xf32> to vector<8x128xf32>
    %62 = arith.addf %59, %61 : vector<8x128xf32>
    %c0_46 = arith.constant 0 : index
    %c0_47 = arith.constant 0 : index
    %63 = vector.load %arg14[%c0_46, %c0_47] : memref<8x128xf32, #tpu.memory_space<vmem>>, vector<8x128xf32>
    tpu.vector_store %arg14[%c0_46, %c0_47], %62 {strides = array<i32>} : memref<8x128xf32, #tpu.memory_space<vmem>>, vector<8x128xf32>,
    return
  }
}

</mosaic_0001>

<llo_original>
// kernel: tpu_custom_call.1
$region0: #{tpu_custom_call.1}
  #allocation0 [shape = 'u32[]', space=smem, size = 0x4, offset = 0x4, fixed_abs, tag = 'smem constant byte address 0x4 - core index']
  #allocation1 [shape = 'u32[144,128]{1,0:T(1,128)}', space=vmem, size = 0x12000, scoped, tag = 'internal scratch']
  %s0 = inlined_call_operand.hbm [shape: bf16[128,128], index: 0, kind: input, shape index: {}]
  %s1 = inlined_call_operand.hbm [shape: bf16[2,128,128], index: 1, kind: input, shape index: {}]
  %s2 = inlined_call_operand.hbm [shape: bf16[8,128], index: 2, kind: input, shape index: {}]
  %s3 = inlined_call_operand.hbm [shape: bf16[128,256], index: 3, kind: input, shape index: {}]
  %s4 = inlined_call_operand.hbm [shape: bf16[128,128], index: 4, kind: input, shape index: {}]
  %s5 = inlined_call_operand.vmem [shape: f32[1,128], index: 5, kind: input, shape index: {}]
  %s6 = inlined_call_operand.hbm [shape: bf16[128,256], index: 6, kind: input, shape index: {}]
  %s7 = inlined_call_operand.hbm [shape: bf16[128,128], index: 7, kind: input, shape index: {}]
  %s8 = inlined_call_operand.vmem [shape: f32[1,128], index: 8, kind: input, shape index: {}]
  %s9 = inlined_call_operand.hbm [shape: bf16[128,256], index: 9, kind: input, shape index: {}]
  %s10 = inlined_call_operand.hbm [shape: bf16[128,128], index: 10, kind: input, shape index: {}]
  %s11 = inlined_call_operand.vmem [shape: f32[1,128], index: 11, kind: input, shape index: {}]
  %s12 = inlined_call_operand.hbm [shape: f32[128,128], index: 12, kind: input, shape index: {}]
  %s13 = inlined_call_operand.vmem [shape: f32[1,128], index: 13, kind: input, shape index: {}]
  %s14 = inlined_call_operand.hbm [shape: f32[8,128], index: 14, kind: output, shape index: {}]
  %s15 = sld [smem:[#allocation0]]
  $region106: #{tpu_custom_call.1} parent=0
    _
  %s17 = ssub.s32 1, %s15
  %s18 = scalar_select 0, %s17, %s15
  $region1: #{tpu_custom_call.1} parent=0
    #allocation2 [shape = 'u8[32768]{0}', space=vmem, size = 0x8000, scoped, tag = 'input window, operand 0, single buffered']
    #allocation3 [shape = 's32[1]{0}', space=sflag, size = 0x4, scoped, tag = 'scoped memory for tpu_custom_call.1']
    #allocation4 [shape = 's32[1]{0}', space=sflag, size = 0x4, scoped, tag = 'scoped memory for tpu_custom_call.1']
    #allocation5 [shape = 'u8[65536]{0}', space=vmem, size = 0x10000, scoped, tag = 'input window, operand 1, single buffered']
    #allocation6 [shape = 's32[1]{0}', space=sflag, size = 0x4, scoped, tag = 'scoped memory for tpu_custom_call.1']
    #allocation7 [shape = 'u8[2048]{0}', space=vmem, size = 0x800, scoped, tag = 'input window, operand 2, single buffered']
    #allocation8 [shape = 'u8[65536]{0}', space=vmem, size = 0x10000, scoped, tag = 'input window, operand 3, single buffered']
    #allocation9 [shape = 's32[1]{0}', space=sflag, size = 0x4, scoped, tag = 'scoped memory for tpu_custom_call.1']
    #allocation10 [shape = 'u8[32768]{0}', space=vmem, size = 0x8000, scoped, tag = 'input window, operand 4, single buffered']
    #allocation11 [shape = 'u8[65536]{0}', space=vmem, size = 0x10000, scoped, tag = 'input window, operand 6, single buffered']
    #allocation12 [shape = 's32[1]{0}', space=sflag, size = 0x4, scoped, tag = 'scoped memory for tpu_custom_call.1']
    #allocation13 [shape = 'u8[32768]{0}', space=vmem, size = 0x8000, scoped, tag = 'input window, operand 7, single buffered']
    #allocation14 [shape = 'u8[65536]{0}', space=vmem, size = 0x10000, scoped, tag = 'input window, operand 9, single buffered']
    #allocation15 [shape = 's32[1]{0}', space=sflag, size = 0x4, scoped, tag = 'scoped memory for tpu_custom_call.1']
    #allocation16 [shape = 'u8[32768]{0}', space=vmem, size = 0x8000, scoped, tag = 'input window, operand 10, single buffered']
    #allocation17 [shape = 'u8[65536]{0}', space=vmem, size = 0x10000, scoped, tag = 'input window, operand 12, single buffered']
    #allocation18 [shape = 's32[1]{0}', space=sflag, size = 0x4, scoped, tag = 'scoped memory for tpu_custom_call.1']
    #allocation19 [shape = 'u8[4096]{0}', space=vmem, size = 0x1000, scoped, tag = 'output window, operand 0, single buffered']
    %19 = vsyncpa [#allocation3], 0
    %20 = vsyncpa [#allocation6], 0
    %21 = vsyncpa [#allocation9], 0
    %22 = vsyncpa [#allocation12], 0
    %23 = vsyncpa [#allocation15], 0
    %24 = vsyncpa [#allocation18], 0
    %25 = vsyncpa [#allocation4], 0
    // Predicated region
    $region2: #{tpu_custom_call.1} parent=1 // pred_check
      _
    $region3: #{tpu_custom_call.1} parent=1 // pred_check_branch
      %27 = sbr.rel (0) target = $region5
    $region4: #{tpu_custom_call.1} parent=1 // pred_region
      %s29 = ssub.s32 1024, 1024
      %30 = vsyncadd [#allocation3], %s29
      %s31 = sshll.u32 [#allocation2], 4
      %s32 = int_to_ptr.vmem [resolvable:$true] %s31
      %37 = dma.hbm_to_vmem [thread:$0]  %s0, 1024, %s32, [#allocation3], 64, 64, 4
    $region5: #{tpu_custom_call.1} parent=1 // pred_fallthru
      _
    // Predicated region
    $region6: #{tpu_custom_call.1} parent=1 // pred_check
      _
    $region7: #{tpu_custom_call.1} parent=1 // pred_check_branch
      %39 = sbr.rel (0) target = $region9
    $region8: #{tpu_custom_call.1} parent=1 // pred_region
      %s41 = ssub.s32 2048, 2048
      %42 = vsyncadd [#allocation6], %s41
      %s43 = sshll.u32 [#allocation5], 4
      %s44 = int_to_ptr.vmem [resolvable:$true] %s43
      %49 = dma.hbm_to_vmem [thread:$0]  %s1, 2048, %s44, [#allocation6], 64, 64, 4
    $region9: #{tpu_custom_call.1} parent=1 // pred_fallthru
      _
    // Predicated region
    $region10: #{tpu_custom_call.1} parent=1 // pred_check
      _
    $region11: #{tpu_custom_call.1} parent=1 // pred_check_branch
      %51 = sbr.rel (0) target = $region13
    $region12: #{tpu_custom_call.1} parent=1 // pred_region
      %s53 = ssub.s32 64, 64
      %54 = vsyncadd [#allocation6], %s53
      %s56 = sshll.u32 [#allocation7], 4
      %s57 = int_to_ptr.vmem [resolvable:$true] %s56
      %59 = dma.hbm_to_vmem [thread:$0]  %s2, 64, %s57, [#allocation6]
    $region13: #{tpu_custom_call.1} parent=1 // pred_fallthru
      _
    // Predicated region
    $region14: #{tpu_custom_call.1} parent=1 // pred_check
      _
    $region15: #{tpu_custom_call.1} parent=1 // pred_check_branch
      %61 = sbr.rel (0) target = $region17
    $region16: #{tpu_custom_call.1} parent=1 // pred_region
      %s63 = ssub.s32 2048, 2048
      %64 = vsyncadd [#allocation9], %s63
      %s65 = sshll.u32 [#allocation8], 4
      %s66 = int_to_ptr.vmem [resolvable:$true] %s65
      %71 = dma.hbm_to_vmem [thread:$0]  %s3, 2048, %s66, [#allocation9], 128, 128, 8
    $region17: #{tpu_custom_call.1} parent=1 // pred_fallthru
      _
    // Predicated region
    $region18: #{tpu_custom_call.1} parent=1 // pred_check
      _
    $region19: #{tpu_custom_call.1} parent=1 // pred_check_branch
      %73 = sbr.rel (0) target = $region21
    $region20: #{tpu_custom_call.1} parent=1 // pred_region
      %s75 = ssub.s32 1024, 1024
      %76 = vsyncadd [#allocation9], %s75
      %s77 = sshll.u32 [#allocation10], 4
      %s78 = int_to_ptr.vmem [resolvable:$true] %s77
      %83 = dma.hbm_to_vmem [thread:$0]  %s4, 1024, %s78, [#allocation9], 64, 64, 4
    $region21: #{tpu_custom_call.1} parent=1 // pred_fallthru
      _
    // Predicated region
    $region22: #{tpu_custom_call.1} parent=1 // pred_check
      _
    $region23: #{tpu_custom_call.1} parent=1 // pred_check_branch
      %85 = sbr.rel (0) target = $region25
    $region24: #{tpu_custom_call.1} parent=1 // pred_region
      _
    $region25: #{tpu_custom_call.1} parent=1 // pred_fallthru
      _
    // Predicated region
    $region26: #{tpu_custom_call.1} parent=1 // pred_check
      _
    $region27: #{tpu_custom_call.1} parent=1 // pred_check_branch
      %87 = sbr.rel (0) target = $region29
    $region28: #{tpu_custom_call.1} parent=1 // pred_region
      %s89 = ssub.s32 2048, 2048
      %90 = vsyncadd [#allocation12], %s89
      %s91 = sshll.u32 [#allocation11], 4
      %s92 = int_to_ptr.vmem [resolvable:$true] %s91
      %97 = dma.hbm_to_vmem [thread:$0]  %s6, 2048, %s92, [#allocation12], 128, 128, 8
    $region29: #{tpu_custom_call.1} parent=1 // pred_fallthru
      _
    // Predicated region
    $region30: #{tpu_custom_call.1} parent=1 // pred_check
      _
    $region31: #{tpu_custom_call.1} parent=1 // pred_check_branch
      %99 = sbr.rel (0) target = $region33
    $region32: #{tpu_custom_call.1} parent=1 // pred_region
      %s101 = ssub.s32 1024, 1024
      %102 = vsyncadd [#allocation12], %s101
      %s103 = sshll.u32 [#allocation13], 4
      %s104 = int_to_ptr.vmem [resolvable:$true] %s103
      %109 = dma.hbm_to_vmem [thread:$0]  %s7, 1024, %s104, [#allocation12], 64, 64, 4
    $region33: #{tpu_custom_call.1} parent=1 // pred_fallthru
      _
    // Predicated region
    $region34: #{tpu_custom_call.1} parent=1 // pred_check
      _
    $region35: #{tpu_custom_call.1} parent=1 // pred_check_branch
      %111 = sbr.rel (0) target = $region37
    $region36: #{tpu_custom_call.1} parent=1 // pred_region
      _
    $region37: #{tpu_custom_call.1} parent=1 // pred_fallthru
      _
    // Predicated region
    $region38: #{tpu_custom_call.1} parent=1 // pred_check
      _
    $region39: #{tpu_custom_call.1} parent=1 // pred_check_branch
      %113 = sbr.rel (0) target = $region41
    $region40: #{tpu_custom_call.1} parent=1 // pred_region
      %s115 = ssub.s32 2048, 2048
      %116 = vsyncadd [#allocation15], %s115
      %s117 = sshll.u32 [#allocation14], 4
      %s118 = int_to_ptr.vmem [resolvable:$true] %s117
      %123 = dma.hbm_to_vmem [thread:$0]  %s9, 2048, %s118, [#allocation15], 128, 128, 8
    $region41: #{tpu_custom_call.1} parent=1 // pred_fallthru
      _
    // Predicated region
    $region42: #{tpu_custom_call.1} parent=1 // pred_check
      _
    $region43: #{tpu_custom_call.1} parent=1 // pred_check_branch
      %125 = sbr.rel (0) target = $region45
    $region44: #{tpu_custom_call.1} parent=1 // pred_region
      %s127 = ssub.s32 1024, 1024
      %128 = vsyncadd [#allocation15], %s127
      %s129 = sshll.u32 [#allocation16], 4
      %s130 = int_to_ptr.vmem [resolvable:$true] %s129
      %135 = dma.hbm_to_vmem [thread:$0]  %s10, 1024, %s130, [#allocation15], 64, 64, 4
    $region45: #{tpu_custom_call.1} parent=1 // pred_fallthru
      _
    // Predicated region
    $region46: #{tpu_custom_call.1} parent=1 // pred_check
      _
    $region47: #{tpu_custom_call.1} parent=1 // pred_check_branch
      %137 = sbr.rel (0) target = $region49
    $region48: #{tpu_custom_call.1} parent=1 // pred_region
      _
    $region49: #{tpu_custom_call.1} parent=1 // pred_fallthru
      _
    // Predicated region
    $region50: #{tpu_custom_call.1} parent=1 // pred_check
      _
    $region51: #{tpu_custom_call.1} parent=1 // pred_check_branch
      %139 = sbr.rel (0) target = $region53
    $region52: #{tpu_custom_call.1} parent=1 // pred_region
      %s141 = ssub.s32 2048, 2048
      %142 = vsyncadd [#allocation18], %s141
      %s143 = sshll.u32 [#allocation17], 4
      %s144 = int_to_ptr.vmem [resolvable:$true] %s143
      %149 = dma.hbm_to_vmem [thread:$0]  %s12, 2048, %s144, [#allocation18], 128, 128, 8
    $region53: #{tpu_custom_call.1} parent=1 // pred_fallthru
      _
    // Predicated region
    $region54: #{tpu_custom_call.1} parent=1 // pred_check
      _
    $region55: #{tpu_custom_call.1} parent=1 // pred_check_branch
      %151 = sbr.rel (0) target = $region57
    $region56: #{tpu_custom_call.1} parent=1 // pred_region
      _
    $region57: #{tpu_custom_call.1} parent=1 // pred_fallthru
      _
    // Predicated region
    $region58: #{tpu_custom_call.1} parent=1 // pred_check
      _
    $region59: #{tpu_custom_call.1} parent=1 // pred_check_branch
      %153 = sbr.rel (0) target = $region61
    $region60: #{tpu_custom_call.1} parent=1 // pred_region
      %154 = dma.done [#allocation3], 1024
    $region61: #{tpu_custom_call.1} parent=1 // pred_fallthru
      _
    // Predicated region
    $region62: #{tpu_custom_call.1} parent=1 // pred_check
      _
    $region63: #{tpu_custom_call.1} parent=1 // pred_check_branch
      %156 = sbr.rel (0) target = $region65
    $region64: #{tpu_custom_call.1} parent=1 // pred_region
      %157 = dma.done [#allocation6], 2048
    $region65: #{tpu_custom_call.1} parent=1 // pred_fallthru
      _
    // Predicated region
    $region66: #{tpu_custom_call.1} parent=1 // pred_check
      _
    $region67: #{tpu_custom_call.1} parent=1 // pred_check_branch
      %159 = sbr.rel (0) target = $region69
    $region68: #{tpu_custom_call.1} parent=1 // pred_region
      %160 = dma.done [#allocation6], 64
    $region69: #{tpu_custom_call.1} parent=1 // pred_fallthru
      _
    // Predicated region
    $region70: #{tpu_custom_call.1} parent=1 // pred_check
      _
    $region71: #{tpu_custom_call.1} parent=1 // pred_check_branch
      %162 = sbr.rel (0) target = $region73
    $region72: #{tpu_custom_call.1} parent=1 // pred_region
      %163 = dma.done [#allocation9], 2048
    $region73: #{tpu_custom_call.1} parent=1 // pred_fallthru
      _
    // Predicated region
    $region74: #{tpu_custom_call.1} parent=1 // pred_check
      _
    $region75: #{tpu_custom_call.1} parent=1 // pred_check_branch
      %165 = sbr.rel (0) target = $region77
    $region76: #{tpu_custom_call.1} parent=1 // pred_region
      %166 = dma.done [#allocation9], 1024
    $region77: #{tpu_custom_call.1} parent=1 // pred_fallthru
      _
    // Predicated region
    $region78: #{tpu_custom_call.1} parent=1 // pred_check
      _
    $region79: #{tpu_custom_call.1} parent=1 // pred_check_branch
      %168 = sbr.rel (0) target = $region81
    $region80: #{tpu_custom_call.1} parent=1 // pred_region
      %169 = dma.done [#allocation12], 2048
    $region81: #{tpu_custom_call.1} parent=1 // pred_fallthru
      _
    // Predicated region
    $region82: #{tpu_custom_call.1} parent=1 // pred_check
      _
    $region83: #{tpu_custom_call.1} parent=1 // pred_check_branch
      %171 = sbr.rel (0) target = $region85
    $region84: #{tpu_custom_call.1} parent=1 // pred_region
      %172 = dma.done [#allocation12], 1024
    $region85: #{tpu_custom_call.1} parent=1 // pred_fallthru
      _
    // Predicated region
    $region86: #{tpu_custom_call.1} parent=1 // pred_check
      _
    $region87: #{tpu_custom_call.1} parent=1 // pred_check_branch
      %174 = sbr.rel (0) target = $region89
    $region88: #{tpu_custom_call.1} parent=1 // pred_region
      %175 = dma.done [#allocation15], 2048
    $region89: #{tpu_custom_call.1} parent=1 // pred_fallthru
      _
    // Predicated region
    $region90: #{tpu_custom_call.1} parent=1 // pred_check
      _
    $region91: #{tpu_custom_call.1} parent=1 // pred_check_branch
      %177 = sbr.rel (0) target = $region93
    $region92: #{tpu_custom_call.1} parent=1 // pred_region
      %178 = dma.done [#allocation15], 1024
    $region93: #{tpu_custom_call.1} parent=1 // pred_fallthru
      _
    // Predicated region
    $region94: #{tpu_custom_call.1} parent=1 // pred_check
      _
    $region95: #{tpu_custom_call.1} parent=1 // pred_check_branch
      %180 = sbr.rel (0) target = $region97
    $region96: #{tpu_custom_call.1} parent=1 // pred_region
      %181 = dma.done [#allocation18], 2048
    $region97: #{tpu_custom_call.1} parent=1 // pred_fallthru
      _
    %v183 = vld [vmem:[#allocation5] sm:$0xf]
    %v184 = vld [vmem:[#allocation5 + $0x4] sm:$0xf]
    %v185 = vld [vmem:[#allocation5 + $0x8] sm:$0xf]
    %v186 = vld [vmem:[#allocation5 + $0xc] sm:$0xf]
    %v187 = vld [vmem:[#allocation5 + $0x10] sm:$0xf]
    %v188 = vld [vmem:[#allocation5 + $0x14] sm:$0xf]
    %v189 = vld [vmem:[#allocation5 + $0x18] sm:$0xf]
    %v190 = vld [vmem:[#allocation5 + $0x1c] sm:$0xf]
    %v191 = vld [vmem:[#allocation5 + $0x20] sm:$0xf]
    %v192 = vld [vmem:[#allocation5 + $0x24] sm:$0xf]
    %v193 = vld [vmem:[#allocation5 + $0x28] sm:$0xf]
    %v194 = vld [vmem:[#allocation5 + $0x2c] sm:$0xf]
    %v195 = vld [vmem:[#allocation5 + $0x30] sm:$0xf]
    %v196 = vld [vmem:[#allocation5 + $0x34] sm:$0xf]
    %v197 = vld [vmem:[#allocation5 + $0x38] sm:$0xf]
    %v198 = vld [vmem:[#allocation5 + $0x3c] sm:$0xf]
    %s199 = scalar_lea.vmem [#allocation5], 64
    %v200 = vld [vmem:[%s199] sm:$0xf]
    %v201 = vld [vmem:[%s199 + $0x4] sm:$0xf]
    %v202 = vld [vmem:[%s199 + $0x8] sm:$0xf]
    %v203 = vld [vmem:[%s199 + $0xc] sm:$0xf]
    %v204 = vld [vmem:[%s199 + $0x10] sm:$0xf]
    %v205 = vld [vmem:[%s199 + $0x14] sm:$0xf]
    %v206 = vld [vmem:[%s199 + $0x18] sm:$0xf]
    %v207 = vld [vmem:[%s199 + $0x1c] sm:$0xf]
    %v208 = vld [vmem:[%s199 + $0x20] sm:$0xf]
    %v209 = vld [vmem:[%s199 + $0x24] sm:$0xf]
    %v210 = vld [vmem:[%s199 + $0x28] sm:$0xf]
    %v211 = vld [vmem:[%s199 + $0x2c] sm:$0xf]
    %v212 = vld [vmem:[%s199 + $0x30] sm:$0xf]
    %v213 = vld [vmem:[%s199 + $0x34] sm:$0xf]
    %v214 = vld [vmem:[%s199 + $0x38] sm:$0xf]
    %v215 = vld [vmem:[%s199 + $0x3c] sm:$0xf]
    %v216 = vld [vmem:[#allocation2] sm:$0xf]
    %v217 = vld [vmem:[#allocation2 + $0x4] sm:$0xf]
    %v218 = vld [vmem:[#allocation2 + $0x8] sm:$0xf]
    %v219 = vld [vmem:[#allocation2 + $0xc] sm:$0xf]
    %v220 = vld [vmem:[#allocation2 + $0x10] sm:$0xf]
    %v221 = vld [vmem:[#allocation2 + $0x14] sm:$0xf]
    %v222 = vld [vmem:[#allocation2 + $0x18] sm:$0xf]
    %v223 = vld [vmem:[#allocation2 + $0x1c] sm:$0xf]
    %v224 = vld [vmem:[#allocation2 + $0x20] sm:$0xf]
    %v225 = vld [vmem:[#allocation2 + $0x24] sm:$0xf]
    %v226 = vld [vmem:[#allocation2 + $0x28] sm:$0xf]
    %v227 = vld [vmem:[#allocation2 + $0x2c] sm:$0xf]
    %v228 = vld [vmem:[#allocation2 + $0x30] sm:$0xf]
    %v229 = vld [vmem:[#allocation2 + $0x34] sm:$0xf]
    %v230 = vld [vmem:[#allocation2 + $0x38] sm:$0xf]
    %v231 = vld [vmem:[#allocation2 + $0x3c] sm:$0xf]
    %v232 = vld [vmem:[#allocation8] sm:$0xff]
    %v233 = vld [vmem:[#allocation8 + $0x8] sm:$0xff]
    %v234 = vld [vmem:[#allocation8 + $0x10] sm:$0xff]
    %v235 = vld [vmem:[#allocation8 + $0x18] sm:$0xff]
    %v236 = vld [vmem:[#allocation8 + $0x20] sm:$0xff]
    %v237 = vld [vmem:[#allocation8 + $0x28] sm:$0xff]
    %v238 = vld [vmem:[#allocation8 + $0x30] sm:$0xff]
    %v239 = vld [vmem:[#allocation8 + $0x38] sm:$0xff]
    %v240 = vld [vmem:[#allocation8 + $0x40] sm:$0xff]
    %v241 = vld [vmem:[#allocation8 + $0x48] sm:$0xff]
    %v242 = vld [vmem:[#allocation8 + $0x50] sm:$0xff]
    %v243 = vld [vmem:[#allocation8 + $0x58] sm:$0xff]
    %v244 = vld [vmem:[#allocation8 + $0x60] sm:$0xff]
    %v245 = vld [vmem:[#allocation8 + $0x68] sm:$0xff]
    %v246 = vld [vmem:[#allocation8 + $0x70] sm:$0xff]
    %v247 = vld [vmem:[#allocation8 + $0x78] sm:$0xff]
    %v264 = vunpack.c.l.b16 %v216
    %v265 = vunpack.c.l.b16 %v217
    %v266 = vunpack.c.l.b16 %v218
    %v267 = vunpack.c.l.b16 %v219
    %v268 = vunpack.c.l.b16 %v220
    %v269 = vunpack.c.l.b16 %v221
    %v270 = vunpack.c.l.b16 %v222
    %v271 = vunpack.c.l.b16 %v223
    %v272 = vunpack.c.l.b16 %v224
    %v273 = vunpack.c.l.b16 %v225
    %v274 = vunpack.c.l.b16 %v226
    %v275 = vunpack.c.l.b16 %v227
    %v276 = vunpack.c.l.b16 %v228
    %v277 = vunpack.c.l.b16 %v229
    %v278 = vunpack.c.l.b16 %v230
    %v279 = vunpack.c.l.b16 %v231
    %v280 = vpack.c.b16 %v265, %v264
    %v281 = vpack.c.b16 %v267, %v266
    %v282 = vpack.c.b16 %v269, %v268
    %v283 = vpack.c.b16 %v271, %v270
    %v284 = vpack.c.b16 %v273, %v272
    %v285 = vpack.c.b16 %v275, %v274
    %v286 = vpack.c.b16 %v277, %v276
    %v287 = vpack.c.b16 %v279, %v278
    %v312 = vunpack.c.l.b16 %v232
    %v313 = vunpack.c.h.b16 %v232
    %v314 = vunpack.c.l.b16 %v233
    %v315 = vunpack.c.h.b16 %v233
    %v316 = vunpack.c.l.b16 %v234
    %v317 = vunpack.c.h.b16 %v234
    %v318 = vunpack.c.l.b16 %v235
    %v319 = vunpack.c.h.b16 %v235
    %v320 = vunpack.c.l.b16 %v236
    %v321 = vunpack.c.h.b16 %v236
    %v322 = vunpack.c.l.b16 %v237
    %v323 = vunpack.c.h.b16 %v237
    %v324 = vunpack.c.l.b16 %v238
    %v325 = vunpack.c.h.b16 %v238
    %v326 = vunpack.c.l.b16 %v239
    %v327 = vunpack.c.h.b16 %v239
    %v328 = vunpack.c.l.b16 %v240
    %v329 = vunpack.c.h.b16 %v240
    %v330 = vunpack.c.l.b16 %v241
    %v331 = vunpack.c.h.b16 %v241
    %v332 = vunpack.c.l.b16 %v242
    %v333 = vunpack.c.h.b16 %v242
    %v334 = vunpack.c.l.b16 %v243
    %v335 = vunpack.c.h.b16 %v243
    %v336 = vunpack.c.l.b16 %v244
    %v337 = vunpack.c.h.b16 %v244
    %v338 = vunpack.c.l.b16 %v245
    %v339 = vunpack.c.h.b16 %v245
    %v340 = vunpack.c.l.b16 %v246
    %v341 = vunpack.c.h.b16 %v246
    %v342 = vunpack.c.l.b16 %v247
    %v343 = vunpack.c.h.b16 %v247
    %v344 = vpack.c.b16 %v314, %v312
    %v345 = vpack.c.b16 %v315, %v313
    %v346 = vpack.c.b16 %v318, %v316
    %v347 = vpack.c.b16 %v319, %v317
    %v348 = vpack.c.b16 %v322, %v320
    %v349 = vpack.c.b16 %v323, %v321
    %v350 = vpack.c.b16 %v326, %v324
    %v351 = vpack.c.b16 %v327, %v325
    %v352 = vpack.c.b16 %v330, %v328
    %v353 = vpack.c.b16 %v331, %v329
    %v354 = vpack.c.b16 %v334, %v332
    %v355 = vpack.c.b16 %v335, %v333
    %v356 = vpack.c.b16 %v338, %v336
    %v357 = vpack.c.b16 %v339, %v337
    %v358 = vpack.c.b16 %v342, %v340
    %v359 = vpack.c.b16 %v343, %v341
    %376 = vmatprep.subr.bf16.mxu0 %v359
    %377 = vmatpush1.bf16.msra.mxu0 %v358
    %378 = vmatprep.subr.bf16.mxu0 %v357
    %379 = vmatpush1.bf16.msra.mxu0 %v356
    %380 = vmatprep.subr.bf16.mxu0 %v355
    %381 = vmatpush1.bf16.msra.mxu0 %v354
    %382 = vmatprep.subr.bf16.mxu0 %v353
    %383 = vmatpush1.bf16.msra.mxu0 %v352
    %384 = vmatprep.subr.bf16.mxu0 %v351
    %385 = vmatpush1.bf16.msra.mxu0 %v350
    %386 = vmatprep.subr.bf16.mxu0 %v349
    %387 = vmatpush1.bf16.msra.mxu0 %v348
    %388 = vmatprep.subr.bf16.mxu0 %v347
    %389 = vmatpush1.bf16.msra.mxu0 %v346
    %390 = vmatprep.subr.bf16.mxu0 %v345
    %391 = vmatpush1.bf16.msra.mxu0 %v344
    %392 = vmatprep.subr.bf16.mxu0 0
    %393 = vmatpush2.bf16.msra.mxu0 0
    %394 = vmatprep.subr.bf16.mxu0 0
    %395 = vmatpush2.bf16.msra.mxu0 0
    %396 = vmatprep.subr.bf16.mxu0 0
    %397 = vmatpush2.bf16.msra.mxu0 0
    %398 = vmatprep.subr.bf16.mxu0 0
    %399 = vmatpush2.bf16.msra.mxu0 0
    %400 = vmatprep.subr.bf16.mxu0 0
    %401 = vmatpush2.bf16.msra.mxu0 0
    %402 = vmatprep.subr.bf16.mxu0 0
    %403 = vmatpush2.bf16.msra.mxu0 0
    %404 = vmatprep.subr.bf16.mxu0 0
    %405 = vmatpush2.bf16.msra.mxu0 0
    %406 = vmatprep.subr.bf16.mxu0 0
    %407 = vmatpush2.bf16.msra.mxu0 0
    %408 = vmatprep.mubr.bf16.mxu0 0
    %409 = vmatmul.mubr.bf16.gmra.mxu0 %v280
    %v410 = vpop.f32.mrf.mxu0
    %v411 = vadd.f32 0.0, %v410
    %v412 = vpop.f32.mrf.mxu0
    %v413 = vadd.f32 0.0, %v412
    %v414 = vpop.f32.mrf.mxu0
    %v415 = vadd.f32 0.0, %v414
    %v416 = vpop.f32.mrf.mxu0
    %v417 = vadd.f32 0.0, %v416
    %418 = vmatprep.mubr.bf16.mxu0 0
    %419 = vmatmul.mubr.bf16.gmra.mxu0 %v281
    %v420 = vpop.f32.mrf.mxu0
    %v421 = vadd.f32 0.0, %v420
    %v422 = vpop.f32.mrf.mxu0
    %v423 = vadd.f32 0.0, %v422
    %v424 = vpop.f32.mrf.mxu0
    %v425 = vadd.f32 0.0, %v424
    %v426 = vpop.f32.mrf.mxu0
    %v427 = vadd.f32 0.0, %v426
    %428 = vmatprep.mubr.bf16.mxu0 0
    %429 = vmatmul.mubr.bf16.gmra.mxu0 %v282
    %v430 = vpop.f32.mrf.mxu0
    %v431 = vadd.f32 0.0, %v430
    %v432 = vpop.f32.mrf.mxu0
    %v433 = vadd.f32 0.0, %v432
    %v434 = vpop.f32.mrf.mxu0
    %v435 = vadd.f32 0.0, %v434
    %v436 = vpop.f32.mrf.mxu0
    %v437 = vadd.f32 0.0, %v436
    %438 = vmatprep.mubr.bf16.mxu0 0
    %439 = vmatmul.mubr.bf16.gmra.mxu0 %v283
    %v440 = vpop.f32.mrf.mxu0
    %v441 = vadd.f32 0.0, %v440
    %v442 = vpop.f32.mrf.mxu0
    %v443 = vadd.f32 0.0, %v442
    %v444 = vpop.f32.mrf.mxu0
    %v445 = vadd.f32 0.0, %v444
    %v446 = vpop.f32.mrf.mxu0
    %v447 = vadd.f32 0.0, %v446
    %448 = vmatprep.mubr.bf16.mxu0 0
    %449 = vmatmul.mubr.bf16.gmra.mxu0 %v284
    %v450 = vpop.f32.mrf.mxu0
    %v451 = vadd.f32 0.0, %v450
    %v452 = vpop.f32.mrf.mxu0
    %v453 = vadd.f32 0.0, %v452
    %v454 = vpop.f32.mrf.mxu0
    %v455 = vadd.f32 0.0, %v454
    %v456 = vpop.f32.mrf.mxu0
    %v457 = vadd.f32 0.0, %v456
    %458 = vmatprep.mubr.bf16.mxu0 0
    %459 = vmatmul.mubr.bf16.gmra.mxu0 %v285
    %v460 = vpop.f32.mrf.mxu0
    %v461 = vadd.f32 0.0, %v460
    %v462 = vpop.f32.mrf.mxu0
    %v463 = vadd.f32 0.0, %v462
    %v464 = vpop.f32.mrf.mxu0
    %v465 = vadd.f32 0.0, %v464
    %v466 = vpop.f32.mrf.mxu0
    %v467 = vadd.f32 0.0, %v466
    %468 = vmatprep.mubr.bf16.mxu0 0
    %469 = vmatmul.mubr.bf16.gmra.mxu0 %v286
    %v470 = vpop.f32.mrf.mxu0
    %v471 = vadd.f32 0.0, %v470
    %v472 = vpop.f32.mrf.mxu0
    %v473 = vadd.f32 0.0, %v472
    %v474 = vpop.f32.mrf.mxu0
    %v475 = vadd.f32 0.0, %v474
    %v476 = vpop.f32.mrf.mxu0
    %v477 = vadd.f32 0.0, %v476
    %478 = vmatprep.mubr.bf16.mxu0 0
    %479 = vmatmul.mubr.bf16.gmra.mxu0 %v287
    %v480 = vpop.f32.mrf.mxu0
    %v481 = vadd.f32 0.0, %v480
    %v482 = vpop.f32.mrf.mxu0
    %v483 = vadd.f32 0.0, %v482
    %v484 = vpop.f32.mrf.mxu0
    %v485 = vadd.f32 0.0, %v484
    %v486 = vpop.f32.mrf.mxu0
    %v487 = vadd.f32 0.0, %v486
    %488 = vdwg.mxu0
    %v489 = vpack.c.bf16 %v415, %v411
    %v490 = vpack.c.bf16 %v417, %v413
    %v491 = vpack.c.bf16 %v425, %v421
    %v492 = vpack.c.bf16 %v427, %v423
    %v493 = vpack.c.bf16 %v435, %v431
    %v494 = vpack.c.bf16 %v437, %v433
    %v495 = vpack.c.bf16 %v445, %v441
    %v496 = vpack.c.bf16 %v447, %v443
    %v497 = vpack.c.bf16 %v455, %v451
    %v498 = vpack.c.bf16 %v457, %v453
    %v499 = vpack.c.bf16 %v465, %v461
    %v500 = vpack.c.bf16 %v467, %v463
    %v501 = vpack.c.bf16 %v475, %v471
    %v502 = vpack.c.bf16 %v477, %v473
    %v503 = vpack.c.bf16 %v485, %v481
    %v504 = vpack.c.bf16 %v487, %v483
    %v521 = vunpack.c.l.b16 %v200
    %v522 = vunpack.c.l.b16 %v201
    %v523 = vunpack.c.l.b16 %v202
    %v524 = vunpack.c.l.b16 %v203
    %v525 = vunpack.c.l.b16 %v204
    %v526 = vunpack.c.l.b16 %v205
    %v527 = vunpack.c.l.b16 %v206
    %v528 = vunpack.c.l.b16 %v207
    %v529 = vunpack.c.l.b16 %v208
    %v530 = vunpack.c.l.b16 %v209
    %v531 = vunpack.c.l.b16 %v210
    %v532 = vunpack.c.l.b16 %v211
    %v533 = vunpack.c.l.b16 %v212
    %v534 = vunpack.c.l.b16 %v213
    %v535 = vunpack.c.l.b16 %v214
    %v536 = vunpack.c.l.b16 %v215
    %v537 = vpack.c.b16 %v522, %v521
    %v538 = vpack.c.b16 %v524, %v523
    %v539 = vpack.c.b16 %v526, %v525
    %v540 = vpack.c.b16 %v528, %v527
    %v541 = vpack.c.b16 %v530, %v529
    %v542 = vpack.c.b16 %v532, %v531
    %v543 = vpack.c.b16 %v534, %v533
    %v544 = vpack.c.b16 %v536, %v535
    %553 = vmatprep.subr.bf16.mxu0 0
    %554 = vmatpush1.bf16.msra.mxu0 %v504
    %555 = vmatprep.subr.bf16.mxu0 0
    %556 = vmatpush1.bf16.msra.mxu0 %v502
    %557 = vmatprep.subr.bf16.mxu0 0
    %558 = vmatpush1.bf16.msra.mxu0 %v500
    %559 = vmatprep.subr.bf16.mxu0 0
    %560 = vmatpush1.bf16.msra.mxu0 %v498
    %561 = vmatprep.subr.bf16.mxu0 0
    %562 = vmatpush1.bf16.msra.mxu0 %v496
    %563 = vmatprep.subr.bf16.mxu0 0
    %564 = vmatpush1.bf16.msra.mxu0 %v494
    %565 = vmatprep.subr.bf16.mxu0 0
    %566 = vmatpush1.bf16.msra.mxu0 %v492
    %567 = vmatprep.subr.bf16.mxu0 0
    %568 = vmatpush1.bf16.msra.mxu0 %v490
    %569 = vmatprep.subr.bf16.mxu0 0
    %570 = vmatpush2.bf16.msra.mxu0 0
    %571 = vmatprep.subr.bf16.mxu0 0
    %572 = vmatpush2.bf16.msra.mxu0 0
    %573 = vmatprep.subr.bf16.mxu0 0
    %574 = vmatpush2.bf16.msra.mxu0 0
    %575 = vmatprep.subr.bf16.mxu0 0
    %576 = vmatpush2.bf16.msra.mxu0 0
    %577 = vmatprep.subr.bf16.mxu0 0
    %578 = vmatpush2.bf16.msra.mxu0 0
    %579 = vmatprep.subr.bf16.mxu0 0
    %580 = vmatpush2.bf16.msra.mxu0 0
    %581 = vmatprep.subr.bf16.mxu0 0
    %582 = vmatpush2.bf16.msra.mxu0 0
    %583 = vmatprep.subr.bf16.mxu0 0
    %584 = vmatpush2.bf16.msra.mxu0 0
    %585 = vmatprep.mubr.bf16.mxu0 0
    %586 = vmatmul.mubr.bf16.gmra.mxu0 %v537
    %v587 = vpop.f32.mrf.mxu0
    %v588 = vadd.f32 0.0, %v587
    %v589 = vpop.f32.mrf.mxu0
    %v590 = vpop.f32.mrf.mxu0
    %v591 = vadd.f32 0.0, %v590
    %v592 = vpop.f32.mrf.mxu0
    %593 = vmatprep.mubr.bf16.mxu0 0
    %594 = vmatmul.mubr.bf16.gmra.mxu0 %v538
    %v595 = vpop.f32.mrf.mxu0
    %v596 = vadd.f32 0.0, %v595
    %v597 = vpop.f32.mrf.mxu0
    %v598 = vpop.f32.mrf.mxu0
    %v599 = vadd.f32 0.0, %v598
    %v600 = vpop.f32.mrf.mxu0
    %601 = vmatprep.mubr.bf16.mxu0 0
    %602 = vmatmul.mubr.bf16.gmra.mxu0 %v539
    %v603 = vpop.f32.mrf.mxu0
    %v604 = vadd.f32 0.0, %v603
    %v605 = vpop.f32.mrf.mxu0
    %v606 = vpop.f32.mrf.mxu0
    %v607 = vadd.f32 0.0, %v606
    %v608 = vpop.f32.mrf.mxu0
    %609 = vmatprep.mubr.bf16.mxu0 0
    %610 = vmatmul.mubr.bf16.gmra.mxu0 %v540
    %v611 = vpop.f32.mrf.mxu0
    %v612 = vadd.f32 0.0, %v611
    %v613 = vpop.f32.mrf.mxu0
    %v614 = vpop.f32.mrf.mxu0
    %v615 = vadd.f32 0.0, %v614
    %v616 = vpop.f32.mrf.mxu0
    %617 = vmatprep.mubr.bf16.mxu0 0
    %618 = vmatmul.mubr.bf16.gmra.mxu0 %v541
    %v619 = vpop.f32.mrf.mxu0
    %v620 = vadd.f32 0.0, %v619
    %v621 = vpop.f32.mrf.mxu0
    %v622 = vpop.f32.mrf.mxu0
    %v623 = vadd.f32 0.0, %v622
    %v624 = vpop.f32.mrf.mxu0
    %625 = vmatprep.mubr.bf16.mxu0 0
    %626 = vmatmul.mubr.bf16.gmra.mxu0 %v542
    %v627 = vpop.f32.mrf.mxu0
    %v628 = vadd.f32 0.0, %v627
    %v629 = vpop.f32.mrf.mxu0
    %v630 = vpop.f32.mrf.mxu0
    %v631 = vadd.f32 0.0, %v630
    %v632 = vpop.f32.mrf.mxu0
    %633 = vmatprep.mubr.bf16.mxu0 0
    %634 = vmatmul.mubr.bf16.gmra.mxu0 %v543
    %v635 = vpop.f32.mrf.mxu0
    %v636 = vadd.f32 0.0, %v635
    %v637 = vpop.f32.mrf.mxu0
    %v638 = vpop.f32.mrf.mxu0
    %v639 = vadd.f32 0.0, %v638
    %v640 = vpop.f32.mrf.mxu0
    %641 = vmatprep.mubr.bf16.mxu0 0
    %642 = vmatmul.mubr.bf16.gmra.mxu0 %v544
    %v643 = vpop.f32.mrf.mxu0
    %v644 = vadd.f32 0.0, %v643
    %v645 = vpop.f32.mrf.mxu0
    %v646 = vpop.f32.mrf.mxu0
    %v647 = vadd.f32 0.0, %v646
    %v648 = vpop.f32.mrf.mxu0
    %649 = vdwg.mxu0
    %v666 = vunpack.c.l.b16 %v183
    %v667 = vunpack.c.l.b16 %v184
    %v668 = vunpack.c.l.b16 %v185
    %v669 = vunpack.c.l.b16 %v186
    %v670 = vunpack.c.l.b16 %v187
    %v671 = vunpack.c.l.b16 %v188
    %v672 = vunpack.c.l.b16 %v189
    %v673 = vunpack.c.l.b16 %v190
    %v674 = vunpack.c.l.b16 %v191
    %v675 = vunpack.c.l.b16 %v192
    %v676 = vunpack.c.l.b16 %v193
    %v677 = vunpack.c.l.b16 %v194
    %v678 = vunpack.c.l.b16 %v195
    %v679 = vunpack.c.l.b16 %v196
    %v680 = vunpack.c.l.b16 %v197
    %v681 = vunpack.c.l.b16 %v198
    %v682 = vpack.c.b16 %v667, %v666
    %v683 = vpack.c.b16 %v669, %v668
    %v684 = vpack.c.b16 %v671, %v670
    %v685 = vpack.c.b16 %v673, %v672
    %v686 = vpack.c.b16 %v675, %v674
    %v687 = vpack.c.b16 %v677, %v676
    %v688 = vpack.c.b16 %v679, %v678
    %v689 = vpack.c.b16 %v681, %v680
    %698 = vmatprep.subr.bf16.mxu0 0
    %699 = vmatpush1.bf16.msra.mxu0 %v503
    %700 = vmatprep.subr.bf16.mxu0 0
    %701 = vmatpush1.bf16.msra.mxu0 %v501
    %702 = vmatprep.subr.bf16.mxu0 0
    %703 = vmatpush1.bf16.msra.mxu0 %v499
    %704 = vmatprep.subr.bf16.mxu0 0
    %705 = vmatpush1.bf16.msra.mxu0 %v497
    %706 = vmatprep.subr.bf16.mxu0 0
    %707 = vmatpush1.bf16.msra.mxu0 %v495
    %708 = vmatprep.subr.bf16.mxu0 0
    %709 = vmatpush1.bf16.msra.mxu0 %v493
    %710 = vmatprep.subr.bf16.mxu0 0
    %711 = vmatpush1.bf16.msra.mxu0 %v491
    %712 = vmatprep.subr.bf16.mxu0 0
    %713 = vmatpush1.bf16.msra.mxu0 %v489
    %714 = vmatprep.subr.bf16.mxu0 0
    %715 = vmatpush2.bf16.msra.mxu0 0
    %716 = vmatprep.subr.bf16.mxu0 0
    %717 = vmatpush2.bf16.msra.mxu0 0
    %718 = vmatprep.subr.bf16.mxu0 0
    %719 = vmatpush2.bf16.msra.mxu0 0
    %720 = vmatprep.subr.bf16.mxu0 0
    %721 = vmatpush2.bf16.msra.mxu0 0
    %722 = vmatprep.subr.bf16.mxu0 0
    %723 = vmatpush2.bf16.msra.mxu0 0
    %724 = vmatprep.subr.bf16.mxu0 0
    %725 = vmatpush2.bf16.msra.mxu0 0
    %726 = vmatprep.subr.bf16.mxu0 0
    %727 = vmatpush2.bf16.msra.mxu0 0
    %728 = vmatprep.subr.bf16.mxu0 0
    %729 = vmatpush2.bf16.msra.mxu0 0
    %730 = vmatprep.mubr.bf16.mxu0 0
    %731 = vmatmul.mubr.bf16.gmra.mxu0 %v682
    %v732 = vpop.f32.mrf.mxu0
    %v733 = vadd.f32 %v588, %v732
    %v734 = vpop.f32.mrf.mxu0
    %v735 = vpop.f32.mrf.mxu0
    %v736 = vadd.f32 %v591, %v735
    %v737 = vpop.f32.mrf.mxu0
    %738 = vmatprep.mubr.bf16.mxu0 0
    %739 = vmatmul.mubr.bf16.gmra.mxu0 %v683
    %v740 = vpop.f32.mrf.mxu0
    %v741 = vadd.f32 %v596, %v740
    %v742 = vpop.f32.mrf.mxu0
    %v743 = vpop.f32.mrf.mxu0
    %v744 = vadd.f32 %v599, %v743
    %v745 = vpop.f32.mrf.mxu0
    %746 = vmatprep.mubr.bf16.mxu0 0
    %747 = vmatmul.mubr.bf16.gmra.mxu0 %v684
    %v748 = vpop.f32.mrf.mxu0
    %v749 = vadd.f32 %v604, %v748
    %v750 = vpop.f32.mrf.mxu0
    %v751 = vpop.f32.mrf.mxu0
    %v752 = vadd.f32 %v607, %v751
    %v753 = vpop.f32.mrf.mxu0
    %754 = vmatprep.mubr.bf16.mxu0 0
    %755 = vmatmul.mubr.bf16.gmra.mxu0 %v685
    %v756 = vpop.f32.mrf.mxu0
    %v757 = vadd.f32 %v612, %v756
    %v758 = vpop.f32.mrf.mxu0
    %v759 = vpop.f32.mrf.mxu0
    %v760 = vadd.f32 %v615, %v759
    %v761 = vpop.f32.mrf.mxu0
    %762 = vmatprep.mubr.bf16.mxu0 0
    %763 = vmatmul.mubr.bf16.gmra.mxu0 %v686
    %v764 = vpop.f32.mrf.mxu0
    %v765 = vadd.f32 %v620, %v764
    %v766 = vpop.f32.mrf.mxu0
    %v767 = vpop.f32.mrf.mxu0
    %v768 = vadd.f32 %v623, %v767
    %v769 = vpop.f32.mrf.mxu0
    %770 = vmatprep.mubr.bf16.mxu0 0
    %771 = vmatmul.mubr.bf16.gmra.mxu0 %v687
    %v772 = vpop.f32.mrf.mxu0
    %v773 = vadd.f32 %v628, %v772
    %v774 = vpop.f32.mrf.mxu0
    %v775 = vpop.f32.mrf.mxu0
    %v776 = vadd.f32 %v631, %v775
    %v777 = vpop.f32.mrf.mxu0
    %778 = vmatprep.mubr.bf16.mxu0 0
    %779 = vmatmul.mubr.bf16.gmra.mxu0 %v688
    %v780 = vpop.f32.mrf.mxu0
    %v781 = vadd.f32 %v636, %v780
    %v782 = vpop.f32.mrf.mxu0
    %v783 = vpop.f32.mrf.mxu0
    %v784 = vadd.f32 %v639, %v783
    %v785 = vpop.f32.mrf.mxu0
    %786 = vmatprep.mubr.bf16.mxu0 0
    %787 = vmatmul.mubr.bf16.gmra.mxu0 %v689
    %v788 = vpop.f32.mrf.mxu0
    %v789 = vadd.f32 %v644, %v788
    %v790 = vpop.f32.mrf.mxu0
    %v791 = vpop.f32.mrf.mxu0
    %v792 = vadd.f32 %v647, %v791
    %v793 = vpop.f32.mrf.mxu0
    %794 = vdwg.mxu0
    %v795 = vld [vmem:[#allocation10] sm:$0xf]
    %v796 = vld [vmem:[#allocation10 + $0x4] sm:$0xf]
    %v797 = vld [vmem:[#allocation10 + $0x8] sm:$0xf]
    %v798 = vld [vmem:[#allocation10 + $0xc] sm:$0xf]
    %v799 = vld [vmem:[#allocation10 + $0x10] sm:$0xf]
    %v800 = vld [vmem:[#allocation10 + $0x14] sm:$0xf]
    %v801 = vld [vmem:[#allocation10 + $0x18] sm:$0xf]
    %v802 = vld [vmem:[#allocation10 + $0x1c] sm:$0xf]
    %v803 = vld [vmem:[#allocation10 + $0x20] sm:$0xf]
    %v804 = vld [vmem:[#allocation10 + $0x24] sm:$0xf]
    %v805 = vld [vmem:[#allocation10 + $0x28] sm:$0xf]
    %v806 = vld [vmem:[#allocation10 + $0x2c] sm:$0xf]
    %v807 = vld [vmem:[#allocation10 + $0x30] sm:$0xf]
    %v808 = vld [vmem:[#allocation10 + $0x34] sm:$0xf]
    %v809 = vld [vmem:[#allocation10 + $0x38] sm:$0xf]
    %v810 = vld [vmem:[#allocation10 + $0x3c] sm:$0xf]
    %v827 = vunpack.c.l.b16 %v795
    %v828 = vunpack.c.l.b16 %v796
    %v829 = vunpack.c.l.b16 %v797
    %v830 = vunpack.c.l.b16 %v798
    %v831 = vunpack.c.l.b16 %v799
    %v832 = vunpack.c.l.b16 %v800
    %v833 = vunpack.c.l.b16 %v801
    %v834 = vunpack.c.l.b16 %v802
    %v835 = vunpack.c.l.b16 %v803
    %v836 = vunpack.c.l.b16 %v804
    %v837 = vunpack.c.l.b16 %v805
    %v838 = vunpack.c.l.b16 %v806
    %v839 = vunpack.c.l.b16 %v807
    %v840 = vunpack.c.l.b16 %v808
    %v841 = vunpack.c.l.b16 %v809
    %v842 = vunpack.c.l.b16 %v810
    %v843 = vpack.c.b16 %v828, %v827
    %v844 = vpack.c.b16 %v830, %v829
    %v845 = vpack.c.b16 %v832, %v831
    %v846 = vpack.c.b16 %v834, %v833
    %v847 = vpack.c.b16 %v836, %v835
    %v848 = vpack.c.b16 %v838, %v837
    %v849 = vpack.c.b16 %v840, %v839
    %v850 = vpack.c.b16 %v842, %v841
    %859 = vmatprep.subr.bf16.mxu0 0
    %860 = vmatpush1.bf16.msra.mxu0 %v850
    %861 = vmatprep.subr.bf16.mxu0 0
    %862 = vmatpush1.bf16.msra.mxu0 %v849
    %863 = vmatprep.subr.bf16.mxu0 0
    %864 = vmatpush1.bf16.msra.mxu0 %v848
    %865 = vmatprep.subr.bf16.mxu0 0
    %866 = vmatpush1.bf16.msra.mxu0 %v847
    %867 = vmatprep.subr.bf16.mxu0 0
    %868 = vmatpush1.bf16.msra.mxu0 %v846
    %869 = vmatprep.subr.bf16.mxu0 0
    %870 = vmatpush1.bf16.msra.mxu0 %v845
    %871 = vmatprep.subr.bf16.mxu0 0
    %872 = vmatpush1.bf16.msra.mxu0 %v844
    %873 = vmatprep.subr.bf16.mxu0 0
    %874 = vmatpush1.bf16.msra.mxu0 %v843
    %875 = vmatprep.subr.bf16.mxu0 0
    %876 = vmatpush2.bf16.msra.mxu0 0
    %877 = vmatprep.subr.bf16.mxu0 0
    %878 = vmatpush2.bf16.msra.mxu0 0
    %879 = vmatprep.subr.bf16.mxu0 0
    %880 = vmatpush2.bf16.msra.mxu0 0
    %881 = vmatprep.subr.bf16.mxu0 0
    %882 = vmatpush2.bf16.msra.mxu0 0
    %883 = vmatprep.subr.bf16.mxu0 0
    %884 = vmatpush2.bf16.msra.mxu0 0
    %885 = vmatprep.subr.bf16.mxu0 0
    %886 = vmatpush2.bf16.msra.mxu0 0
    %887 = vmatprep.subr.bf16.mxu0 0
    %888 = vmatpush2.bf16.msra.mxu0 0
    %889 = vmatprep.subr.bf16.mxu0 0
    %890 = vmatpush2.bf16.msra.mxu0 0
    %891 = vmatprep.mubr.bf16.mxu0 0
    %892 = vmatmul.mubr.bf16.gmra.mxu0 %v280
    %v893 = vpop.f32.mrf.mxu0
    %v894 = vadd.f32 0.0, %v893
    %v895 = vpop.f32.mrf.mxu0
    %v896 = vpop.f32.mrf.mxu0
    %v897 = vadd.f32 0.0, %v896
    %v898 = vpop.f32.mrf.mxu0
    %899 = vmatprep.mubr.bf16.mxu0 0
    %900 = vmatmul.mubr.bf16.gmra.mxu0 %v281
    %v901 = vpop.f32.mrf.mxu0
    %v902 = vadd.f32 0.0, %v901
    %v903 = vpop.f32.mrf.mxu0
    %v904 = vpop.f32.mrf.mxu0
    %v905 = vadd.f32 0.0, %v904
    %v906 = vpop.f32.mrf.mxu0
    %907 = vmatprep.mubr.bf16.mxu0 0
    %908 = vmatmul.mubr.bf16.gmra.mxu0 %v282
    %v909 = vpop.f32.mrf.mxu0
    %v910 = vadd.f32 0.0, %v909
    %v911 = vpop.f32.mrf.mxu0
    %v912 = vpop.f32.mrf.mxu0
    %v913 = vadd.f32 0.0, %v912
    %v914 = vpop.f32.mrf.mxu0
    %915 = vmatprep.mubr.bf16.mxu0 0
    %916 = vmatmul.mubr.bf16.gmra.mxu0 %v283
    %v917 = vpop.f32.mrf.mxu0
    %v918 = vadd.f32 0.0, %v917
    %v919 = vpop.f32.mrf.mxu0
    %v920 = vpop.f32.mrf.mxu0
    %v921 = vadd.f32 0.0, %v920
    %v922 = vpop.f32.mrf.mxu0
    %923 = vmatprep.mubr.bf16.mxu0 0
    %924 = vmatmul.mubr.bf16.gmra.mxu0 %v284
    %v925 = vpop.f32.mrf.mxu0
    %v926 = vadd.f32 0.0, %v925
    %v927 = vpop.f32.mrf.mxu0
    %v928 = vpop.f32.mrf.mxu0
    %v929 = vadd.f32 0.0, %v928
    %v930 = vpop.f32.mrf.mxu0
    %931 = vmatprep.mubr.bf16.mxu0 0
    %932 = vmatmul.mubr.bf16.gmra.mxu0 %v285
    %v933 = vpop.f32.mrf.mxu0
    %v934 = vadd.f32 0.0, %v933
    %v935 = vpop.f32.mrf.mxu0
    %v936 = vpop.f32.mrf.mxu0
    %v937 = vadd.f32 0.0, %v936
    %v938 = vpop.f32.mrf.mxu0
    %939 = vmatprep.mubr.bf16.mxu0 0
    %940 = vmatmul.mubr.bf16.gmra.mxu0 %v286
    %v941 = vpop.f32.mrf.mxu0
    %v942 = vadd.f32 0.0, %v941
    %v943 = vpop.f32.mrf.mxu0
    %v944 = vpop.f32.mrf.mxu0
    %v945 = vadd.f32 0.0, %v944
    %v946 = vpop.f32.mrf.mxu0
    %947 = vmatprep.mubr.bf16.mxu0 0
    %948 = vmatmul.mubr.bf16.gmra.mxu0 %v287
    %v949 = vpop.f32.mrf.mxu0
    %v950 = vadd.f32 0.0, %v949
    %v951 = vpop.f32.mrf.mxu0
    %v952 = vpop.f32.mrf.mxu0
    %v953 = vadd.f32 0.0, %v952
    %v954 = vpop.f32.mrf.mxu0
    %955 = vdwg.mxu0
    %v956 = vadd.f32 %v733, %v894
    %v957 = vadd.f32 %v736, %v897
    %v958 = vadd.f32 %v741, %v902
    %v959 = vadd.f32 %v744, %v905
    %v960 = vadd.f32 %v749, %v910
    %v961 = vadd.f32 %v752, %v913
    %v962 = vadd.f32 %v757, %v918
    %v963 = vadd.f32 %v760, %v921
    %v964 = vadd.f32 %v765, %v926
    %v965 = vadd.f32 %v768, %v929
    %v966 = vadd.f32 %v773, %v934
    %v967 = vadd.f32 %v776, %v937
    %v968 = vadd.f32 %v781, %v942
    %v969 = vadd.f32 %v784, %v945
    %v970 = vadd.f32 %v789, %v950
    %v971 = vadd.f32 %v792, %v953
    %v972 = vld [vmem:[%s5] sm:$0x1]
    %v974 = vlaneseq
    %v975 = vshrl.u32 %v974, 7
    %v976 = vsub.s32 0, %v975
    %v977 = vrot.slane %v972, %v976
    %v979 = vadd.f32 %v956, %v977
    %v980 = vadd.f32 %v957, %v977
    %v981 = vadd.f32 %v958, %v977
    %v982 = vadd.f32 %v959, %v977
    %v983 = vadd.f32 %v960, %v977
    %v984 = vadd.f32 %v961, %v977
    %v985 = vadd.f32 %v962, %v977
    %v986 = vadd.f32 %v963, %v977
    %v987 = vadd.f32 %v964, %v977
    %v988 = vadd.f32 %v965, %v977
    %v989 = vadd.f32 %v966, %v977
    %v990 = vadd.f32 %v967, %v977
    %v991 = vadd.f32 %v968, %v977
    %v992 = vadd.f32 %v969, %v977
    %v993 = vadd.f32 %v970, %v977
    %v994 = vadd.f32 %v971, %v977
    %v995 = vmax.f32 %v979, 0.0
    %v996 = vmax.f32 %v980, 0.0
    %v997 = vmax.f32 %v981, 0.0
    %v998 = vmax.f32 %v982, 0.0
    %v999 = vmax.f32 %v983, 0.0
    %v1000 = vmax.f32 %v984, 0.0
    %v1001 = vmax.f32 %v985, 0.0
    %v1002 = vmax.f32 %v986, 0.0
    %v1003 = vmax.f32 %v987, 0.0
    %v1004 = vmax.f32 %v988, 0.0
    %v1005 = vmax.f32 %v989, 0.0
    %v1006 = vmax.f32 %v990, 0.0
    %v1007 = vmax.f32 %v991, 0.0
    %v1008 = vmax.f32 %v992, 0.0
    %v1009 = vmax.f32 %v993, 0.0
    %v1010 = vmax.f32 %v994, 0.0
    %v1011 = vpack.c.bf16 %v996, %v995
    %v1012 = vpack.c.bf16 %v998, %v997
    %v1013 = vpack.c.bf16 %v1000, %v999
    %v1014 = vpack.c.bf16 %v1002, %v1001
    %v1015 = vpack.c.bf16 %v1004, %v1003
    %v1016 = vpack.c.bf16 %v1006, %v1005
    %v1017 = vpack.c.bf16 %v1008, %v1007
    %v1018 = vpack.c.bf16 %v1010, %v1009
    %v1019 = vld [vmem:[#allocation11] sm:$0xff]
    %v1020 = vld [vmem:[#allocation11 + $0x8] sm:$0xff]
    %v1021 = vld [vmem:[#allocation11 + $0x10] sm:$0xff]
    %v1022 = vld [vmem:[#allocation11 + $0x18] sm:$0xff]
    %v1023 = vld [vmem:[#allocation11 + $0x20] sm:$0xff]
    %v1024 = vld [vmem:[#allocation11 + $0x28] sm:$0xff]
    %v1025 = vld [vmem:[#allocation11 + $0x30] sm:$0xff]
    %v1026 = vld [vmem:[#allocation11 + $0x38] sm:$0xff]
    %v1027 = vld [vmem:[#allocation11 + $0x40] sm:$0xff]
    %v1028 = vld [vmem:[#allocation11 + $0x48] sm:$0xff]
    %v1029 = vld [vmem:[#allocation11 + $0x50] sm:$0xff]
    %v1030 = vld [vmem:[#allocation11 + $0x58] sm:$0xff]
    %v1031 = vld [vmem:[#allocation11 + $0x60] sm:$0xff]
    %v1032 = vld [vmem:[#allocation11 + $0x68] sm:$0xff]
    %v1033 = vld [vmem:[#allocation11 + $0x70] sm:$0xff]
    %v1034 = vld [vmem:[#allocation11 + $0x78] sm:$0xff]
    %v1051 = vunpack.c.l.b16 %v1019
    %v1052 = vunpack.c.h.b16 %v1019
    %v1053 = vunpack.c.l.b16 %v1020
    %v1054 = vunpack.c.h.b16 %v1020
    %v1055 = vunpack.c.l.b16 %v1021
    %v1056 = vunpack.c.h.b16 %v1021
    %v1057 = vunpack.c.l.b16 %v1022
    %v1058 = vunpack.c.h.b16 %v1022
    %v1059 = vunpack.c.l.b16 %v1023
    %v1060 = vunpack.c.h.b16 %v1023
    %v1061 = vunpack.c.l.b16 %v1024
    %v1062 = vunpack.c.h.b16 %v1024
    %v1063 = vunpack.c.l.b16 %v1025
    %v1064 = vunpack.c.h.b16 %v1025
    %v1065 = vunpack.c.l.b16 %v1026
    %v1066 = vunpack.c.h.b16 %v1026
    %v1067 = vunpack.c.l.b16 %v1027
    %v1068 = vunpack.c.h.b16 %v1027
    %v1069 = vunpack.c.l.b16 %v1028
    %v1070 = vunpack.c.h.b16 %v1028
    %v1071 = vunpack.c.l.b16 %v1029
    %v1072 = vunpack.c.h.b16 %v1029
    %v1073 = vunpack.c.l.b16 %v1030
    %v1074 = vunpack.c.h.b16 %v1030
    %v1075 = vunpack.c.l.b16 %v1031
    %v1076 = vunpack.c.h.b16 %v1031
    %v1077 = vunpack.c.l.b16 %v1032
    %v1078 = vunpack.c.h.b16 %v1032
    %v1079 = vunpack.c.l.b16 %v1033
    %v1080 = vunpack.c.h.b16 %v1033
    %v1081 = vunpack.c.l.b16 %v1034
    %v1082 = vunpack.c.h.b16 %v1034
    %v1083 = vpack.c.b16 %v1053, %v1051
    %v1084 = vpack.c.b16 %v1054, %v1052
    %v1085 = vpack.c.b16 %v1057, %v1055
    %v1086 = vpack.c.b16 %v1058, %v1056
    %v1087 = vpack.c.b16 %v1061, %v1059
    %v1088 = vpack.c.b16 %v1062, %v1060
    %v1089 = vpack.c.b16 %v1065, %v1063
    %v1090 = vpack.c.b16 %v1066, %v1064
    %v1091 = vpack.c.b16 %v1069, %v1067
    %v1092 = vpack.c.b16 %v1070, %v1068
    %v1093 = vpack.c.b16 %v1073, %v1071
    %v1094 = vpack.c.b16 %v1074, %v1072
    %v1095 = vpack.c.b16 %v1077, %v1075
    %v1096 = vpack.c.b16 %v1078, %v1076
    %v1097 = vpack.c.b16 %v1081, %v1079
    %v1098 = vpack.c.b16 %v1082, %v1080
    %1115 = vmatprep.subr.bf16.mxu0 %v1098
    %1116 = vmatpush1.bf16.msra.mxu0 %v1097
    %1117 = vmatprep.subr.bf16.mxu0 %v1096
    %1118 = vmatpush1.bf16.msra.mxu0 %v1095
    %1119 = vmatprep.subr.bf16.mxu0 %v1094
    %1120 = vmatpush1.bf16.msra.mxu0 %v1093
    %1121 = vmatprep.subr.bf16.mxu0 %v1092
    %1122 = vmatpush1.bf16.msra.mxu0 %v1091
    %1123 = vmatprep.subr.bf16.mxu0 %v1090
    %1124 = vmatpush1.bf16.msra.mxu0 %v1089
    %1125 = vmatprep.subr.bf16.mxu0 %v1088
    %1126 = vmatpush1.bf16.msra.mxu0 %v1087
    %1127 = vmatprep.subr.bf16.mxu0 %v1086
    %1128 = vmatpush1.bf16.msra.mxu0 %v1085
    %1129 = vmatprep.subr.bf16.mxu0 %v1084
    %1130 = vmatpush1.bf16.msra.mxu0 %v1083
    %1131 = vmatprep.subr.bf16.mxu0 0
    %1132 = vmatpush2.bf16.msra.mxu0 0
    %1133 = vmatprep.subr.bf16.mxu0 0
    %1134 = vmatpush2.bf16.msra.mxu0 0
    %1135 = vmatprep.subr.bf16.mxu0 0
    %1136 = vmatpush2.bf16.msra.mxu0 0
    %1137 = vmatprep.subr.bf16.mxu0 0
    %1138 = vmatpush2.bf16.msra.mxu0 0
    %1139 = vmatprep.subr.bf16.mxu0 0
    %1140 = vmatpush2.bf16.msra.mxu0 0
    %1141 = vmatprep.subr.bf16.mxu0 0
    %1142 = vmatpush2.bf16.msra.mxu0 0
    %1143 = vmatprep.subr.bf16.mxu0 0
    %1144 = vmatpush2.bf16.msra.mxu0 0
    %1145 = vmatprep.subr.bf16.mxu0 0
    %1146 = vmatpush2.bf16.msra.mxu0 0
    %1147 = vmatprep.mubr.bf16.mxu0 0
    %1148 = vmatmul.mubr.bf16.gmra.mxu0 %v1011
    %v1149 = vpop.f32.mrf.mxu0
    %v1150 = vadd.f32 0.0, %v1149
    %v1151 = vpop.f32.mrf.mxu0
    %v1152 = vadd.f32 0.0, %v1151
    %v1153 = vpop.f32.mrf.mxu0
    %v1154 = vadd.f32 0.0, %v1153
    %v1155 = vpop.f32.mrf.mxu0
    %v1156 = vadd.f32 0.0, %v1155
    %1157 = vmatprep.mubr.bf16.mxu0 0
    %1158 = vmatmul.mubr.bf16.gmra.mxu0 %v1012
    %v1159 = vpop.f32.mrf.mxu0
    %v1160 = vadd.f32 0.0, %v1159
    %v1161 = vpop.f32.mrf.mxu0
    %v1162 = vadd.f32 0.0, %v1161
    %v1163 = vpop.f32.mrf.mxu0
    %v1164 = vadd.f32 0.0, %v1163
    %v1165 = vpop.f32.mrf.mxu0
    %v1166 = vadd.f32 0.0, %v1165
    %1167 = vmatprep.mubr.bf16.mxu0 0
    %1168 = vmatmul.mubr.bf16.gmra.mxu0 %v1013
    %v1169 = vpop.f32.mrf.mxu0
    %v1170 = vadd.f32 0.0, %v1169
    %v1171 = vpop.f32.mrf.mxu0
    %v1172 = vadd.f32 0.0, %v1171
    %v1173 = vpop.f32.mrf.mxu0
    %v1174 = vadd.f32 0.0, %v1173
    %v1175 = vpop.f32.mrf.mxu0
    %v1176 = vadd.f32 0.0, %v1175
    %1177 = vmatprep.mubr.bf16.mxu0 0
    %1178 = vmatmul.mubr.bf16.gmra.mxu0 %v1014
    %v1179 = vpop.f32.mrf.mxu0
    %v1180 = vadd.f32 0.0, %v1179
    %v1181 = vpop.f32.mrf.mxu0
    %v1182 = vadd.f32 0.0, %v1181
    %v1183 = vpop.f32.mrf.mxu0
    %v1184 = vadd.f32 0.0, %v1183
    %v1185 = vpop.f32.mrf.mxu0
    %v1186 = vadd.f32 0.0, %v1185
    %1187 = vmatprep.mubr.bf16.mxu0 0
    %1188 = vmatmul.mubr.bf16.gmra.mxu0 %v1015
    %v1189 = vpop.f32.mrf.mxu0
    %v1190 = vadd.f32 0.0, %v1189
    %v1191 = vpop.f32.mrf.mxu0
    %v1192 = vadd.f32 0.0, %v1191
    %v1193 = vpop.f32.mrf.mxu0
    %v1194 = vadd.f32 0.0, %v1193
    %v1195 = vpop.f32.mrf.mxu0
    %v1196 = vadd.f32 0.0, %v1195
    %1197 = vmatprep.mubr.bf16.mxu0 0
    %1198 = vmatmul.mubr.bf16.gmra.mxu0 %v1016
    %v1199 = vpop.f32.mrf.mxu0
    %v1200 = vadd.f32 0.0, %v1199
    %v1201 = vpop.f32.mrf.mxu0
    %v1202 = vadd.f32 0.0, %v1201
    %v1203 = vpop.f32.mrf.mxu0
    %v1204 = vadd.f32 0.0, %v1203
    %v1205 = vpop.f32.mrf.mxu0
    %v1206 = vadd.f32 0.0, %v1205
    %1207 = vmatprep.mubr.bf16.mxu0 0
    %1208 = vmatmul.mubr.bf16.gmra.mxu0 %v1017
    %v1209 = vpop.f32.mrf.mxu0
    %v1210 = vadd.f32 0.0, %v1209
    %v1211 = vpop.f32.mrf.mxu0
    %v1212 = vadd.f32 0.0, %v1211
    %v1213 = vpop.f32.mrf.mxu0
    %v1214 = vadd.f32 0.0, %v1213
    %v1215 = vpop.f32.mrf.mxu0
    %v1216 = vadd.f32 0.0, %v1215
    %1217 = vmatprep.mubr.bf16.mxu0 0
    %1218 = vmatmul.mubr.bf16.gmra.mxu0 %v1018
    %v1219 = vpop.f32.mrf.mxu0
    %v1220 = vadd.f32 0.0, %v1219
    %v1221 = vpop.f32.mrf.mxu0
    %v1222 = vadd.f32 0.0, %v1221
    %v1223 = vpop.f32.mrf.mxu0
    %v1224 = vadd.f32 0.0, %v1223
    %v1225 = vpop.f32.mrf.mxu0
    %v1226 = vadd.f32 0.0, %v1225
    %1227 = vdwg.mxu0
    %v1228 = vpack.c.bf16 %v1154, %v1150
    %v1229 = vpack.c.bf16 %v1156, %v1152
    %v1230 = vpack.c.bf16 %v1164, %v1160
    %v1231 = vpack.c.bf16 %v1166, %v1162
    %v1232 = vpack.c.bf16 %v1174, %v1170
    %v1233 = vpack.c.bf16 %v1176, %v1172
    %v1234 = vpack.c.bf16 %v1184, %v1180
    %v1235 = vpack.c.bf16 %v1186, %v1182
    %v1236 = vpack.c.bf16 %v1194, %v1190
    %v1237 = vpack.c.bf16 %v1196, %v1192
    %v1238 = vpack.c.bf16 %v1204, %v1200
    %v1239 = vpack.c.bf16 %v1206, %v1202
    %v1240 = vpack.c.bf16 %v1214, %v1210
    %v1241 = vpack.c.bf16 %v1216, %v1212
    %v1242 = vpack.c.bf16 %v1224, %v1220
    %v1243 = vpack.c.bf16 %v1226, %v1222
    %1244 = vmatprep.subr.bf16.mxu0 0
    %1245 = vmatpush1.bf16.msra.mxu0 %v1243
    %1246 = vmatprep.subr.bf16.mxu0 0
    %1247 = vmatpush1.bf16.msra.mxu0 %v1241
    %1248 = vmatprep.subr.bf16.mxu0 0
    %1249 = vmatpush1.bf16.msra.mxu0 %v1239
    %1250 = vmatprep.subr.bf16.mxu0 0
    %1251 = vmatpush1.bf16.msra.mxu0 %v1237
    %1252 = vmatprep.subr.bf16.mxu0 0
    %1253 = vmatpush1.bf16.msra.mxu0 %v1235
    %1254 = vmatprep.subr.bf16.mxu0 0
    %1255 = vmatpush1.bf16.msra.mxu0 %v1233
    %1256 = vmatprep.subr.bf16.mxu0 0
    %1257 = vmatpush1.bf16.msra.mxu0 %v1231
    %1258 = vmatprep.subr.bf16.mxu0 0
    %1259 = vmatpush1.bf16.msra.mxu0 %v1229
    %1260 = vmatprep.subr.bf16.mxu0 0
    %1261 = vmatpush2.bf16.msra.mxu0 0
    %1262 = vmatprep.subr.bf16.mxu0 0
    %1263 = vmatpush2.bf16.msra.mxu0 0
    %1264 = vmatprep.subr.bf16.mxu0 0
    %1265 = vmatpush2.bf16.msra.mxu0 0
    %1266 = vmatprep.subr.bf16.mxu0 0
    %1267 = vmatpush2.bf16.msra.mxu0 0
    %1268 = vmatprep.subr.bf16.mxu0 0
    %1269 = vmatpush2.bf16.msra.mxu0 0
    %1270 = vmatprep.subr.bf16.mxu0 0
    %1271 = vmatpush2.bf16.msra.mxu0 0
    %1272 = vmatprep.subr.bf16.mxu0 0
    %1273 = vmatpush2.bf16.msra.mxu0 0
    %1274 = vmatprep.subr.bf16.mxu0 0
    %1275 = vmatpush2.bf16.msra.mxu0 0
    %1276 = vmatprep.mubr.bf16.mxu0 0
    %1277 = vmatmul.mubr.bf16.gmra.mxu0 %v537
    %v1278 = vpop.f32.mrf.mxu0
    %v1279 = vadd.f32 0.0, %v1278
    %v1280 = vpop.f32.mrf.mxu0
    %v1281 = vpop.f32.mrf.mxu0
    %v1282 = vadd.f32 0.0, %v1281
    %v1283 = vpop.f32.mrf.mxu0
    %1284 = vmatprep.mubr.bf16.mxu0 0
    %1285 = vmatmul.mubr.bf16.gmra.mxu0 %v538
    %v1286 = vpop.f32.mrf.mxu0
    %v1287 = vadd.f32 0.0, %v1286
    %v1288 = vpop.f32.mrf.mxu0
    %v1289 = vpop.f32.mrf.mxu0
    %v1290 = vadd.f32 0.0, %v1289
    %v1291 = vpop.f32.mrf.mxu0
    %1292 = vmatprep.mubr.bf16.mxu0 0
    %1293 = vmatmul.mubr.bf16.gmra.mxu0 %v539
    %v1294 = vpop.f32.mrf.mxu0
    %v1295 = vadd.f32 0.0, %v1294
    %v1296 = vpop.f32.mrf.mxu0
    %v1297 = vpop.f32.mrf.mxu0
    %v1298 = vadd.f32 0.0, %v1297
    %v1299 = vpop.f32.mrf.mxu0
    %1300 = vmatprep.mubr.bf16.mxu0 0
    %1301 = vmatmul.mubr.bf16.gmra.mxu0 %v540
    %v1302 = vpop.f32.mrf.mxu0
    %v1303 = vadd.f32 0.0, %v1302
    %v1304 = vpop.f32.mrf.mxu0
    %v1305 = vpop.f32.mrf.mxu0
    %v1306 = vadd.f32 0.0, %v1305
    %v1307 = vpop.f32.mrf.mxu0
    %1308 = vmatprep.mubr.bf16.mxu0 0
    %1309 = vmatmul.mubr.bf16.gmra.mxu0 %v541
    %v1310 = vpop.f32.mrf.mxu0
    %v1311 = vadd.f32 0.0, %v1310
    %v1312 = vpop.f32.mrf.mxu0
    %v1313 = vpop.f32.mrf.mxu0
    %v1314 = vadd.f32 0.0, %v1313
    %v1315 = vpop.f32.mrf.mxu0
    %1316 = vmatprep.mubr.bf16.mxu0 0
    %1317 = vmatmul.mubr.bf16.gmra.mxu0 %v542
    %v1318 = vpop.f32.mrf.mxu0
    %v1319 = vadd.f32 0.0, %v1318
    %v1320 = vpop.f32.mrf.mxu0
    %v1321 = vpop.f32.mrf.mxu0
    %v1322 = vadd.f32 0.0, %v1321
    %v1323 = vpop.f32.mrf.mxu0
    %1324 = vmatprep.mubr.bf16.mxu0 0
    %1325 = vmatmul.mubr.bf16.gmra.mxu0 %v543
    %v1326 = vpop.f32.mrf.mxu0
    %v1327 = vadd.f32 0.0, %v1326
    %v1328 = vpop.f32.mrf.mxu0
    %v1329 = vpop.f32.mrf.mxu0
    %v1330 = vadd.f32 0.0, %v1329
    %v1331 = vpop.f32.mrf.mxu0
    %1332 = vmatprep.mubr.bf16.mxu0 0
    %1333 = vmatmul.mubr.bf16.gmra.mxu0 %v544
    %v1334 = vpop.f32.mrf.mxu0
    %v1335 = vadd.f32 0.0, %v1334
    %v1336 = vpop.f32.mrf.mxu0
    %v1337 = vpop.f32.mrf.mxu0
    %v1338 = vadd.f32 0.0, %v1337
    %v1339 = vpop.f32.mrf.mxu0
    %1340 = vdwg.mxu0
    %1341 = vmatprep.subr.bf16.mxu0 0
    %1342 = vmatpush1.bf16.msra.mxu0 %v1242
    %1343 = vmatprep.subr.bf16.mxu0 0
    %1344 = vmatpush1.bf16.msra.mxu0 %v1240
    %1345 = vmatprep.subr.bf16.mxu0 0
    %1346 = vmatpush1.bf16.msra.mxu0 %v1238
    %1347 = vmatprep.subr.bf16.mxu0 0
    %1348 = vmatpush1.bf16.msra.mxu0 %v1236
    %1349 = vmatprep.subr.bf16.mxu0 0
    %1350 = vmatpush1.bf16.msra.mxu0 %v1234
    %1351 = vmatprep.subr.bf16.mxu0 0
    %1352 = vmatpush1.bf16.msra.mxu0 %v1232
    %1353 = vmatprep.subr.bf16.mxu0 0
    %1354 = vmatpush1.bf16.msra.mxu0 %v1230
    %1355 = vmatprep.subr.bf16.mxu0 0
    %1356 = vmatpush1.bf16.msra.mxu0 %v1228
    %1357 = vmatprep.subr.bf16.mxu0 0
    %1358 = vmatpush2.bf16.msra.mxu0 0
    %1359 = vmatprep.subr.bf16.mxu0 0
    %1360 = vmatpush2.bf16.msra.mxu0 0
    %1361 = vmatprep.subr.bf16.mxu0 0
    %1362 = vmatpush2.bf16.msra.mxu0 0
    %1363 = vmatprep.subr.bf16.mxu0 0
    %1364 = vmatpush2.bf16.msra.mxu0 0
    %1365 = vmatprep.subr.bf16.mxu0 0
    %1366 = vmatpush2.bf16.msra.mxu0 0
    %1367 = vmatprep.subr.bf16.mxu0 0
    %1368 = vmatpush2.bf16.msra.mxu0 0
    %1369 = vmatprep.subr.bf16.mxu0 0
    %1370 = vmatpush2.bf16.msra.mxu0 0
    %1371 = vmatprep.subr.bf16.mxu0 0
    %1372 = vmatpush2.bf16.msra.mxu0 0
    %1373 = vmatprep.mubr.bf16.mxu0 0
    %1374 = vmatmul.mubr.bf16.gmra.mxu0 %v682
    %v1375 = vpop.f32.mrf.mxu0
    %v1376 = vadd.f32 %v1279, %v1375
    %v1377 = vpop.f32.mrf.mxu0
    %v1378 = vpop.f32.mrf.mxu0
    %v1379 = vadd.f32 %v1282, %v1378
    %v1380 = vpop.f32.mrf.mxu0
    %1381 = vmatprep.mubr.bf16.mxu0 0
    %1382 = vmatmul.mubr.bf16.gmra.mxu0 %v683
    %v1383 = vpop.f32.mrf.mxu0
    %v1384 = vadd.f32 %v1287, %v1383
    %v1385 = vpop.f32.mrf.mxu0
    %v1386 = vpop.f32.mrf.mxu0
    %v1387 = vadd.f32 %v1290, %v1386
    %v1388 = vpop.f32.mrf.mxu0
    %1389 = vmatprep.mubr.bf16.mxu0 0
    %1390 = vmatmul.mubr.bf16.gmra.mxu0 %v684
    %v1391 = vpop.f32.mrf.mxu0
    %v1392 = vadd.f32 %v1295, %v1391
    %v1393 = vpop.f32.mrf.mxu0
    %v1394 = vpop.f32.mrf.mxu0
    %v1395 = vadd.f32 %v1298, %v1394
    %v1396 = vpop.f32.mrf.mxu0
    %1397 = vmatprep.mubr.bf16.mxu0 0
    %1398 = vmatmul.mubr.bf16.gmra.mxu0 %v685
    %v1399 = vpop.f32.mrf.mxu0
    %v1400 = vadd.f32 %v1303, %v1399
    %v1401 = vpop.f32.mrf.mxu0
    %v1402 = vpop.f32.mrf.mxu0
    %v1403 = vadd.f32 %v1306, %v1402
    %v1404 = vpop.f32.mrf.mxu0
    %1405 = vmatprep.mubr.bf16.mxu0 0
    %1406 = vmatmul.mubr.bf16.gmra.mxu0 %v686
    %v1407 = vpop.f32.mrf.mxu0
    %v1408 = vadd.f32 %v1311, %v1407
    %v1409 = vpop.f32.mrf.mxu0
    %v1410 = vpop.f32.mrf.mxu0
    %v1411 = vadd.f32 %v1314, %v1410
    %v1412 = vpop.f32.mrf.mxu0
    %1413 = vmatprep.mubr.bf16.mxu0 0
    %1414 = vmatmul.mubr.bf16.gmra.mxu0 %v687
    %v1415 = vpop.f32.mrf.mxu0
    %v1416 = vadd.f32 %v1319, %v1415
    %v1417 = vpop.f32.mrf.mxu0
    %v1418 = vpop.f32.mrf.mxu0
    %v1419 = vadd.f32 %v1322, %v1418
    %v1420 = vpop.f32.mrf.mxu0
    %1421 = vmatprep.mubr.bf16.mxu0 0
    %1422 = vmatmul.mubr.bf16.gmra.mxu0 %v688
    %v1423 = vpop.f32.mrf.mxu0
    %v1424 = vadd.f32 %v1327, %v1423
    %v1425 = vpop.f32.mrf.mxu0
    %v1426 = vpop.f32.mrf.mxu0
    %v1427 = vadd.f32 %v1330, %v1426
    %v1428 = vpop.f32.mrf.mxu0
    %1429 = vmatprep.mubr.bf16.mxu0 0
    %1430 = vmatmul.mubr.bf16.gmra.mxu0 %v689
    %v1431 = vpop.f32.mrf.mxu0
    %v1432 = vadd.f32 %v1335, %v1431
    %v1433 = vpop.f32.mrf.mxu0
    %v1434 = vpop.f32.mrf.mxu0
    %v1435 = vadd.f32 %v1338, %v1434
    %v1436 = vpop.f32.mrf.mxu0
    %1437 = vdwg.mxu0
    %v1438 = vld [vmem:[#allocation13] sm:$0xf]
    %v1439 = vld [vmem:[#allocation13 + $0x4] sm:$0xf]
    %v1440 = vld [vmem:[#allocation13 + $0x8] sm:$0xf]
    %v1441 = vld [vmem:[#allocation13 + $0xc] sm:$0xf]
    %v1442 = vld [vmem:[#allocation13 + $0x10] sm:$0xf]
    %v1443 = vld [vmem:[#allocation13 + $0x14] sm:$0xf]
    %v1444 = vld [vmem:[#allocation13 + $0x18] sm:$0xf]
    %v1445 = vld [vmem:[#allocation13 + $0x1c] sm:$0xf]
    %v1446 = vld [vmem:[#allocation13 + $0x20] sm:$0xf]
    %v1447 = vld [vmem:[#allocation13 + $0x24] sm:$0xf]
    %v1448 = vld [vmem:[#allocation13 + $0x28] sm:$0xf]
    %v1449 = vld [vmem:[#allocation13 + $0x2c] sm:$0xf]
    %v1450 = vld [vmem:[#allocation13 + $0x30] sm:$0xf]
    %v1451 = vld [vmem:[#allocation13 + $0x34] sm:$0xf]
    %v1452 = vld [vmem:[#allocation13 + $0x38] sm:$0xf]
    %v1453 = vld [vmem:[#allocation13 + $0x3c] sm:$0xf]
    %v1470 = vunpack.c.l.b16 %v1438
    %v1471 = vunpack.c.l.b16 %v1439
    %v1472 = vunpack.c.l.b16 %v1440
    %v1473 = vunpack.c.l.b16 %v1441
    %v1474 = vunpack.c.l.b16 %v1442
    %v1475 = vunpack.c.l.b16 %v1443
    %v1476 = vunpack.c.l.b16 %v1444
    %v1477 = vunpack.c.l.b16 %v1445
    %v1478 = vunpack.c.l.b16 %v1446
    %v1479 = vunpack.c.l.b16 %v1447
    %v1480 = vunpack.c.l.b16 %v1448
    %v1481 = vunpack.c.l.b16 %v1449
    %v1482 = vunpack.c.l.b16 %v1450
    %v1483 = vunpack.c.l.b16 %v1451
    %v1484 = vunpack.c.l.b16 %v1452
    %v1485 = vunpack.c.l.b16 %v1453
    %v1486 = vpack.c.b16 %v1471, %v1470
    %v1487 = vpack.c.b16 %v1473, %v1472
    %v1488 = vpack.c.b16 %v1475, %v1474
    %v1489 = vpack.c.b16 %v1477, %v1476
    %v1490 = vpack.c.b16 %v1479, %v1478
    %v1491 = vpack.c.b16 %v1481, %v1480
    %v1492 = vpack.c.b16 %v1483, %v1482
    %v1493 = vpack.c.b16 %v1485, %v1484
    %1502 = vmatprep.subr.bf16.mxu0 0
    %1503 = vmatpush1.bf16.msra.mxu0 %v1493
    %1504 = vmatprep.subr.bf16.mxu0 0
    %1505 = vmatpush1.bf16.msra.mxu0 %v1492
    %1506 = vmatprep.subr.bf16.mxu0 0
    %1507 = vmatpush1.bf16.msra.mxu0 %v1491
    %1508 = vmatprep.subr.bf16.mxu0 0
    %1509 = vmatpush1.bf16.msra.mxu0 %v1490
    %1510 = vmatprep.subr.bf16.mxu0 0
    %1511 = vmatpush1.bf16.msra.mxu0 %v1489
    %1512 = vmatprep.subr.bf16.mxu0 0
    %1513 = vmatpush1.bf16.msra.mxu0 %v1488
    %1514 = vmatprep.subr.bf16.mxu0 0
    %1515 = vmatpush1.bf16.msra.mxu0 %v1487
    %1516 = vmatprep.subr.bf16.mxu0 0
    %1517 = vmatpush1.bf16.msra.mxu0 %v1486
    %1518 = vmatprep.subr.bf16.mxu0 0
    %1519 = vmatpush2.bf16.msra.mxu0 0
    %1520 = vmatprep.subr.bf16.mxu0 0
    %1521 = vmatpush2.bf16.msra.mxu0 0
    %1522 = vmatprep.subr.bf16.mxu0 0
    %1523 = vmatpush2.bf16.msra.mxu0 0
    %1524 = vmatprep.subr.bf16.mxu0 0
    %1525 = vmatpush2.bf16.msra.mxu0 0
    %1526 = vmatprep.subr.bf16.mxu0 0
    %1527 = vmatpush2.bf16.msra.mxu0 0
    %1528 = vmatprep.subr.bf16.mxu0 0
    %1529 = vmatpush2.bf16.msra.mxu0 0
    %1530 = vmatprep.subr.bf16.mxu0 0
    %1531 = vmatpush2.bf16.msra.mxu0 0
    %1532 = vmatprep.subr.bf16.mxu0 0
    %1533 = vmatpush2.bf16.msra.mxu0 0
    %1534 = vmatprep.mubr.bf16.mxu0 0
    %1535 = vmatmul.mubr.bf16.gmra.mxu0 %v1011
    %v1536 = vpop.f32.mrf.mxu0
    %v1537 = vadd.f32 0.0, %v1536
    %v1538 = vpop.f32.mrf.mxu0
    %v1539 = vpop.f32.mrf.mxu0
    %v1540 = vadd.f32 0.0, %v1539
    %v1541 = vpop.f32.mrf.mxu0
    %1542 = vmatprep.mubr.bf16.mxu0 0
    %1543 = vmatmul.mubr.bf16.gmra.mxu0 %v1012
    %v1544 = vpop.f32.mrf.mxu0
    %v1545 = vadd.f32 0.0, %v1544
    %v1546 = vpop.f32.mrf.mxu0
    %v1547 = vpop.f32.mrf.mxu0
    %v1548 = vadd.f32 0.0, %v1547
    %v1549 = vpop.f32.mrf.mxu0
    %1550 = vmatprep.mubr.bf16.mxu0 0
    %1551 = vmatmul.mubr.bf16.gmra.mxu0 %v1013
    %v1552 = vpop.f32.mrf.mxu0
    %v1553 = vadd.f32 0.0, %v1552
    %v1554 = vpop.f32.mrf.mxu0
    %v1555 = vpop.f32.mrf.mxu0
    %v1556 = vadd.f32 0.0, %v1555
    %v1557 = vpop.f32.mrf.mxu0
    %1558 = vmatprep.mubr.bf16.mxu0 0
    %1559 = vmatmul.mubr.bf16.gmra.mxu0 %v1014
    %v1560 = vpop.f32.mrf.mxu0
    %v1561 = vadd.f32 0.0, %v1560
    %v1562 = vpop.f32.mrf.mxu0
    %v1563 = vpop.f32.mrf.mxu0
    %v1564 = vadd.f32 0.0, %v1563
    %v1565 = vpop.f32.mrf.mxu0
    %1566 = vmatprep.mubr.bf16.mxu0 0
    %1567 = vmatmul.mubr.bf16.gmra.mxu0 %v1015
    %v1568 = vpop.f32.mrf.mxu0
    %v1569 = vadd.f32 0.0, %v1568
    %v1570 = vpop.f32.mrf.mxu0
    %v1571 = vpop.f32.mrf.mxu0
    %v1572 = vadd.f32 0.0, %v1571
    %v1573 = vpop.f32.mrf.mxu0
    %1574 = vmatprep.mubr.bf16.mxu0 0
    %1575 = vmatmul.mubr.bf16.gmra.mxu0 %v1016
    %v1576 = vpop.f32.mrf.mxu0
    %v1577 = vadd.f32 0.0, %v1576
    %v1578 = vpop.f32.mrf.mxu0
    %v1579 = vpop.f32.mrf.mxu0
    %v1580 = vadd.f32 0.0, %v1579
    %v1581 = vpop.f32.mrf.mxu0
    %1582 = vmatprep.mubr.bf16.mxu0 0
    %1583 = vmatmul.mubr.bf16.gmra.mxu0 %v1017
    %v1584 = vpop.f32.mrf.mxu0
    %v1585 = vadd.f32 0.0, %v1584
    %v1586 = vpop.f32.mrf.mxu0
    %v1587 = vpop.f32.mrf.mxu0
    %v1588 = vadd.f32 0.0, %v1587
    %v1589 = vpop.f32.mrf.mxu0
    %1590 = vmatprep.mubr.bf16.mxu0 0
    %1591 = vmatmul.mubr.bf16.gmra.mxu0 %v1018
    %v1592 = vpop.f32.mrf.mxu0
    %v1593 = vadd.f32 0.0, %v1592
    %v1594 = vpop.f32.mrf.mxu0
    %v1595 = vpop.f32.mrf.mxu0
    %v1596 = vadd.f32 0.0, %v1595
    %v1597 = vpop.f32.mrf.mxu0
    %1598 = vdwg.mxu0
    %v1599 = vadd.f32 %v1376, %v1537
    %v1600 = vadd.f32 %v1379, %v1540
    %v1601 = vadd.f32 %v1384, %v1545
    %v1602 = vadd.f32 %v1387, %v1548
    %v1603 = vadd.f32 %v1392, %v1553
    %v1604 = vadd.f32 %v1395, %v1556
    %v1605 = vadd.f32 %v1400, %v1561
    %v1606 = vadd.f32 %v1403, %v1564
    %v1607 = vadd.f32 %v1408, %v1569
    %v1608 = vadd.f32 %v1411, %v1572
    %v1609 = vadd.f32 %v1416, %v1577
    %v1610 = vadd.f32 %v1419, %v1580
    %v1611 = vadd.f32 %v1424, %v1585
    %v1612 = vadd.f32 %v1427, %v1588
    %v1613 = vadd.f32 %v1432, %v1593
    %v1614 = vadd.f32 %v1435, %v1596
    %v1615 = vld [vmem:[%s8] sm:$0x1]
    %v1617 = vlaneseq
    %v1618 = vshrl.u32 %v1617, 7
    %v1619 = vsub.s32 0, %v1618
    %v1620 = vrot.slane %v1615, %v1619
    %v1622 = vadd.f32 %v1599, %v1620
    %v1623 = vadd.f32 %v1600, %v1620
    %v1624 = vadd.f32 %v1601, %v1620
    %v1625 = vadd.f32 %v1602, %v1620
    %v1626 = vadd.f32 %v1603, %v1620
    %v1627 = vadd.f32 %v1604, %v1620
    %v1628 = vadd.f32 %v1605, %v1620
    %v1629 = vadd.f32 %v1606, %v1620
    %v1630 = vadd.f32 %v1607, %v1620
    %v1631 = vadd.f32 %v1608, %v1620
    %v1632 = vadd.f32 %v1609, %v1620
    %v1633 = vadd.f32 %v1610, %v1620
    %v1634 = vadd.f32 %v1611, %v1620
    %v1635 = vadd.f32 %v1612, %v1620
    %v1636 = vadd.f32 %v1613, %v1620
    %v1637 = vadd.f32 %v1614, %v1620
    %v1638 = vmax.f32 %v1622, 0.0
    %v1639 = vmax.f32 %v1623, 0.0
    %v1640 = vmax.f32 %v1624, 0.0
    %v1641 = vmax.f32 %v1625, 0.0
    %v1642 = vmax.f32 %v1626, 0.0
    %v1643 = vmax.f32 %v1627, 0.0
    %v1644 = vmax.f32 %v1628, 0.0
    %v1645 = vmax.f32 %v1629, 0.0
    %v1646 = vmax.f32 %v1630, 0.0
    %v1647 = vmax.f32 %v1631, 0.0
    %v1648 = vmax.f32 %v1632, 0.0
    %v1649 = vmax.f32 %v1633, 0.0
    %v1650 = vmax.f32 %v1634, 0.0
    %v1651 = vmax.f32 %v1635, 0.0
    %v1652 = vmax.f32 %v1636, 0.0
    %v1653 = vmax.f32 %v1637, 0.0
    %v1654 = vpack.c.bf16 %v1639, %v1638
    %v1655 = vpack.c.bf16 %v1641, %v1640
    %v1656 = vpack.c.bf16 %v1643, %v1642
    %v1657 = vpack.c.bf16 %v1645, %v1644
    %v1658 = vpack.c.bf16 %v1647, %v1646
    %v1659 = vpack.c.bf16 %v1649, %v1648
    %v1660 = vpack.c.bf16 %v1651, %v1650
    %v1661 = vpack.c.bf16 %v1653, %v1652
    %v1662 = vld [vmem:[#allocation14] sm:$0xff]
    %v1663 = vld [vmem:[#allocation14 + $0x8] sm:$0xff]
    %v1664 = vld [vmem:[#allocation14 + $0x10] sm:$0xff]
    %v1665 = vld [vmem:[#allocation14 + $0x18] sm:$0xff]
    %v1666 = vld [vmem:[#allocation14 + $0x20] sm:$0xff]
    %v1667 = vld [vmem:[#allocation14 + $0x28] sm:$0xff]
    %v1668 = vld [vmem:[#allocation14 + $0x30] sm:$0xff]
    %v1669 = vld [vmem:[#allocation14 + $0x38] sm:$0xff]
    %v1670 = vld [vmem:[#allocation14 + $0x40] sm:$0xff]
    %v1671 = vld [vmem:[#allocation14 + $0x48] sm:$0xff]
    %v1672 = vld [vmem:[#allocation14 + $0x50] sm:$0xff]
    %v1673 = vld [vmem:[#allocation14 + $0x58] sm:$0xff]
    %v1674 = vld [vmem:[#allocation14 + $0x60] sm:$0xff]
    %v1675 = vld [vmem:[#allocation14 + $0x68] sm:$0xff]
    %v1676 = vld [vmem:[#allocation14 + $0x70] sm:$0xff]
    %v1677 = vld [vmem:[#allocation14 + $0x78] sm:$0xff]
    %v1694 = vunpack.c.l.b16 %v1662
    %v1695 = vunpack.c.h.b16 %v1662
    %v1696 = vunpack.c.l.b16 %v1663
    %v1697 = vunpack.c.h.b16 %v1663
    %v1698 = vunpack.c.l.b16 %v1664
    %v1699 = vunpack.c.h.b16 %v1664
    %v1700 = vunpack.c.l.b16 %v1665
    %v1701 = vunpack.c.h.b16 %v1665
    %v1702 = vunpack.c.l.b16 %v1666
    %v1703 = vunpack.c.h.b16 %v1666
    %v1704 = vunpack.c.l.b16 %v1667
    %v1705 = vunpack.c.h.b16 %v1667
    %v1706 = vunpack.c.l.b16 %v1668
    %v1707 = vunpack.c.h.b16 %v1668
    %v1708 = vunpack.c.l.b16 %v1669
    %v1709 = vunpack.c.h.b16 %v1669
    %v1710 = vunpack.c.l.b16 %v1670
    %v1711 = vunpack.c.h.b16 %v1670
    %v1712 = vunpack.c.l.b16 %v1671
    %v1713 = vunpack.c.h.b16 %v1671
    %v1714 = vunpack.c.l.b16 %v1672
    %v1715 = vunpack.c.h.b16 %v1672
    %v1716 = vunpack.c.l.b16 %v1673
    %v1717 = vunpack.c.h.b16 %v1673
    %v1718 = vunpack.c.l.b16 %v1674
    %v1719 = vunpack.c.h.b16 %v1674
    %v1720 = vunpack.c.l.b16 %v1675
    %v1721 = vunpack.c.h.b16 %v1675
    %v1722 = vunpack.c.l.b16 %v1676
    %v1723 = vunpack.c.h.b16 %v1676
    %v1724 = vunpack.c.l.b16 %v1677
    %v1725 = vunpack.c.h.b16 %v1677
    %v1726 = vpack.c.b16 %v1696, %v1694
    %v1727 = vpack.c.b16 %v1697, %v1695
    %v1728 = vpack.c.b16 %v1700, %v1698
    %v1729 = vpack.c.b16 %v1701, %v1699
    %v1730 = vpack.c.b16 %v1704, %v1702
    %v1731 = vpack.c.b16 %v1705, %v1703
    %v1732 = vpack.c.b16 %v1708, %v1706
    %v1733 = vpack.c.b16 %v1709, %v1707
    %v1734 = vpack.c.b16 %v1712, %v1710
    %v1735 = vpack.c.b16 %v1713, %v1711
    %v1736 = vpack.c.b16 %v1716, %v1714
    %v1737 = vpack.c.b16 %v1717, %v1715
    %v1738 = vpack.c.b16 %v1720, %v1718
    %v1739 = vpack.c.b16 %v1721, %v1719
    %v1740 = vpack.c.b16 %v1724, %v1722
    %v1741 = vpack.c.b16 %v1725, %v1723
    %1758 = vmatprep.subr.bf16.mxu0 %v1741
    %1759 = vmatpush1.bf16.msra.mxu0 %v1740
    %1760 = vmatprep.subr.bf16.mxu0 %v1739
    %1761 = vmatpush1.bf16.msra.mxu0 %v1738
    %1762 = vmatprep.subr.bf16.mxu0 %v1737
    %1763 = vmatpush1.bf16.msra.mxu0 %v1736
    %1764 = vmatprep.subr.bf16.mxu0 %v1735
    %1765 = vmatpush1.bf16.msra.mxu0 %v1734
    %1766 = vmatprep.subr.bf16.mxu0 %v1733
    %1767 = vmatpush1.bf16.msra.mxu0 %v1732
    %1768 = vmatprep.subr.bf16.mxu0 %v1731
    %1769 = vmatpush1.bf16.msra.mxu0 %v1730
    %1770 = vmatprep.subr.bf16.mxu0 %v1729
    %1771 = vmatpush1.bf16.msra.mxu0 %v1728
    %1772 = vmatprep.subr.bf16.mxu0 %v1727
    %1773 = vmatpush1.bf16.msra.mxu0 %v1726
    %1774 = vmatprep.subr.bf16.mxu0 0
    %1775 = vmatpush2.bf16.msra.mxu0 0
    %1776 = vmatprep.subr.bf16.mxu0 0
    %1777 = vmatpush2.bf16.msra.mxu0 0
    %1778 = vmatprep.subr.bf16.mxu0 0
    %1779 = vmatpush2.bf16.msra.mxu0 0
    %1780 = vmatprep.subr.bf16.mxu0 0
    %1781 = vmatpush2.bf16.msra.mxu0 0
    %1782 = vmatprep.subr.bf16.mxu0 0
    %1783 = vmatpush2.bf16.msra.mxu0 0
    %1784 = vmatprep.subr.bf16.mxu0 0
    %1785 = vmatpush2.bf16.msra.mxu0 0
    %1786 = vmatprep.subr.bf16.mxu0 0
    %1787 = vmatpush2.bf16.msra.mxu0 0
    %1788 = vmatprep.subr.bf16.mxu0 0
    %1789 = vmatpush2.bf16.msra.mxu0 0
    %1790 = vmatprep.mubr.bf16.mxu0 0
    %1791 = vmatmul.mubr.bf16.gmra.mxu0 %v1654
    %v1792 = vpop.f32.mrf.mxu0
    %v1793 = vadd.f32 0.0, %v1792
    %v1794 = vpop.f32.mrf.mxu0
    %v1795 = vadd.f32 0.0, %v1794
    %v1796 = vpop.f32.mrf.mxu0
    %v1797 = vadd.f32 0.0, %v1796
    %v1798 = vpop.f32.mrf.mxu0
    %v1799 = vadd.f32 0.0, %v1798
    %1800 = vmatprep.mubr.bf16.mxu0 0
    %1801 = vmatmul.mubr.bf16.gmra.mxu0 %v1655
    %v1802 = vpop.f32.mrf.mxu0
    %v1803 = vadd.f32 0.0, %v1802
    %v1804 = vpop.f32.mrf.mxu0
    %v1805 = vadd.f32 0.0, %v1804
    %v1806 = vpop.f32.mrf.mxu0
    %v1807 = vadd.f32 0.0, %v1806
    %v1808 = vpop.f32.mrf.mxu0
    %v1809 = vadd.f32 0.0, %v1808
    %1810 = vmatprep.mubr.bf16.mxu0 0
    %1811 = vmatmul.mubr.bf16.gmra.mxu0 %v1656
    %v1812 = vpop.f32.mrf.mxu0
    %v1813 = vadd.f32 0.0, %v1812
    %v1814 = vpop.f32.mrf.mxu0
    %v1815 = vadd.f32 0.0, %v1814
    %v1816 = vpop.f32.mrf.mxu0
    %v1817 = vadd.f32 0.0, %v1816
    %v1818 = vpop.f32.mrf.mxu0
    %v1819 = vadd.f32 0.0, %v1818
    %1820 = vmatprep.mubr.bf16.mxu0 0
    %1821 = vmatmul.mubr.bf16.gmra.mxu0 %v1657
    %v1822 = vpop.f32.mrf.mxu0
    %v1823 = vadd.f32 0.0, %v1822
    %v1824 = vpop.f32.mrf.mxu0
    %v1825 = vadd.f32 0.0, %v1824
    %v1826 = vpop.f32.mrf.mxu0
    %v1827 = vadd.f32 0.0, %v1826
    %v1828 = vpop.f32.mrf.mxu0
    %v1829 = vadd.f32 0.0, %v1828
    %1830 = vmatprep.mubr.bf16.mxu0 0
    %1831 = vmatmul.mubr.bf16.gmra.mxu0 %v1658
    %v1832 = vpop.f32.mrf.mxu0
    %v1833 = vadd.f32 0.0, %v1832
    %v1834 = vpop.f32.mrf.mxu0
    %v1835 = vadd.f32 0.0, %v1834
    %v1836 = vpop.f32.mrf.mxu0
    %v1837 = vadd.f32 0.0, %v1836
    %v1838 = vpop.f32.mrf.mxu0
    %v1839 = vadd.f32 0.0, %v1838
    %1840 = vmatprep.mubr.bf16.mxu0 0
    %1841 = vmatmul.mubr.bf16.gmra.mxu0 %v1659
    %v1842 = vpop.f32.mrf.mxu0
    %v1843 = vadd.f32 0.0, %v1842
    %v1844 = vpop.f32.mrf.mxu0
    %v1845 = vadd.f32 0.0, %v1844
    %v1846 = vpop.f32.mrf.mxu0
    %v1847 = vadd.f32 0.0, %v1846
    %v1848 = vpop.f32.mrf.mxu0
    %v1849 = vadd.f32 0.0, %v1848
    %1850 = vmatprep.mubr.bf16.mxu0 0
    %1851 = vmatmul.mubr.bf16.gmra.mxu0 %v1660
    %v1852 = vpop.f32.mrf.mxu0
    %v1853 = vadd.f32 0.0, %v1852
    %v1854 = vpop.f32.mrf.mxu0
    %v1855 = vadd.f32 0.0, %v1854
    %v1856 = vpop.f32.mrf.mxu0
    %v1857 = vadd.f32 0.0, %v1856
    %v1858 = vpop.f32.mrf.mxu0
    %v1859 = vadd.f32 0.0, %v1858
    %1860 = vmatprep.mubr.bf16.mxu0 0
    %1861 = vmatmul.mubr.bf16.gmra.mxu0 %v1661
    %v1862 = vpop.f32.mrf.mxu0
    %v1863 = vadd.f32 0.0, %v1862
    %v1864 = vpop.f32.mrf.mxu0
    %v1865 = vadd.f32 0.0, %v1864
    %v1866 = vpop.f32.mrf.mxu0
    %v1867 = vadd.f32 0.0, %v1866
    %v1868 = vpop.f32.mrf.mxu0
    %v1869 = vadd.f32 0.0, %v1868
    %1870 = vdwg.mxu0
    %v1871 = vpack.c.bf16 %v1797, %v1793
    %v1872 = vpack.c.bf16 %v1799, %v1795
    %v1873 = vpack.c.bf16 %v1807, %v1803
    %v1874 = vpack.c.bf16 %v1809, %v1805
    %v1875 = vpack.c.bf16 %v1817, %v1813
    %v1876 = vpack.c.bf16 %v1819, %v1815
    %v1877 = vpack.c.bf16 %v1827, %v1823
    %v1878 = vpack.c.bf16 %v1829, %v1825
    %v1879 = vpack.c.bf16 %v1837, %v1833
    %v1880 = vpack.c.bf16 %v1839, %v1835
    %v1881 = vpack.c.bf16 %v1847, %v1843
    %v1882 = vpack.c.bf16 %v1849, %v1845
    %v1883 = vpack.c.bf16 %v1857, %v1853
    %v1884 = vpack.c.bf16 %v1859, %v1855
    %v1885 = vpack.c.bf16 %v1867, %v1863
    %v1886 = vpack.c.bf16 %v1869, %v1865
    %1887 = vmatprep.subr.bf16.mxu0 0
    %1888 = vmatpush1.bf16.msra.mxu0 %v1886
    %1889 = vmatprep.subr.bf16.mxu0 0
    %1890 = vmatpush1.bf16.msra.mxu0 %v1884
    %1891 = vmatprep.subr.bf16.mxu0 0
    %1892 = vmatpush1.bf16.msra.mxu0 %v1882
    %1893 = vmatprep.subr.bf16.mxu0 0
    %1894 = vmatpush1.bf16.msra.mxu0 %v1880
    %1895 = vmatprep.subr.bf16.mxu0 0
    %1896 = vmatpush1.bf16.msra.mxu0 %v1878
    %1897 = vmatprep.subr.bf16.mxu0 0
    %1898 = vmatpush1.bf16.msra.mxu0 %v1876
    %1899 = vmatprep.subr.bf16.mxu0 0
    %1900 = vmatpush1.bf16.msra.mxu0 %v1874
    %1901 = vmatprep.subr.bf16.mxu0 0
    %1902 = vmatpush1.bf16.msra.mxu0 %v1872
    %1903 = vmatprep.subr.bf16.mxu0 0
    %1904 = vmatpush2.bf16.msra.mxu0 0
    %1905 = vmatprep.subr.bf16.mxu0 0
    %1906 = vmatpush2.bf16.msra.mxu0 0
    %1907 = vmatprep.subr.bf16.mxu0 0
    %1908 = vmatpush2.bf16.msra.mxu0 0
    %1909 = vmatprep.subr.bf16.mxu0 0
    %1910 = vmatpush2.bf16.msra.mxu0 0
    %1911 = vmatprep.subr.bf16.mxu0 0
    %1912 = vmatpush2.bf16.msra.mxu0 0
    %1913 = vmatprep.subr.bf16.mxu0 0
    %1914 = vmatpush2.bf16.msra.mxu0 0
    %1915 = vmatprep.subr.bf16.mxu0 0
    %1916 = vmatpush2.bf16.msra.mxu0 0
    %1917 = vmatprep.subr.bf16.mxu0 0
    %1918 = vmatpush2.bf16.msra.mxu0 0
    %1919 = vmatprep.mubr.bf16.mxu0 0
    %1920 = vmatmul.mubr.bf16.gmra.mxu0 %v537
    %v1921 = vpop.f32.mrf.mxu0
    %v1922 = vadd.f32 0.0, %v1921
    %v1923 = vpop.f32.mrf.mxu0
    %v1924 = vpop.f32.mrf.mxu0
    %v1925 = vadd.f32 0.0, %v1924
    %v1926 = vpop.f32.mrf.mxu0
    %1927 = vmatprep.mubr.bf16.mxu0 0
    %1928 = vmatmul.mubr.bf16.gmra.mxu0 %v538
    %v1929 = vpop.f32.mrf.mxu0
    %v1930 = vadd.f32 0.0, %v1929
    %v1931 = vpop.f32.mrf.mxu0
    %v1932 = vpop.f32.mrf.mxu0
    %v1933 = vadd.f32 0.0, %v1932
    %v1934 = vpop.f32.mrf.mxu0
    %1935 = vmatprep.mubr.bf16.mxu0 0
    %1936 = vmatmul.mubr.bf16.gmra.mxu0 %v539
    %v1937 = vpop.f32.mrf.mxu0
    %v1938 = vadd.f32 0.0, %v1937
    %v1939 = vpop.f32.mrf.mxu0
    %v1940 = vpop.f32.mrf.mxu0
    %v1941 = vadd.f32 0.0, %v1940
    %v1942 = vpop.f32.mrf.mxu0
    %1943 = vmatprep.mubr.bf16.mxu0 0
    %1944 = vmatmul.mubr.bf16.gmra.mxu0 %v540
    %v1945 = vpop.f32.mrf.mxu0
    %v1946 = vadd.f32 0.0, %v1945
    %v1947 = vpop.f32.mrf.mxu0
    %v1948 = vpop.f32.mrf.mxu0
    %v1949 = vadd.f32 0.0, %v1948
    %v1950 = vpop.f32.mrf.mxu0
    %1951 = vmatprep.mubr.bf16.mxu0 0
    %1952 = vmatmul.mubr.bf16.gmra.mxu0 %v541
    %v1953 = vpop.f32.mrf.mxu0
    %v1954 = vadd.f32 0.0, %v1953
    %v1955 = vpop.f32.mrf.mxu0
    %v1956 = vpop.f32.mrf.mxu0
    %v1957 = vadd.f32 0.0, %v1956
    %v1958 = vpop.f32.mrf.mxu0
    %1959 = vmatprep.mubr.bf16.mxu0 0
    %1960 = vmatmul.mubr.bf16.gmra.mxu0 %v542
    %v1961 = vpop.f32.mrf.mxu0
    %v1962 = vadd.f32 0.0, %v1961
    %v1963 = vpop.f32.mrf.mxu0
    %v1964 = vpop.f32.mrf.mxu0
    %v1965 = vadd.f32 0.0, %v1964
    %v1966 = vpop.f32.mrf.mxu0
    %1967 = vmatprep.mubr.bf16.mxu0 0
    %1968 = vmatmul.mubr.bf16.gmra.mxu0 %v543
    %v1969 = vpop.f32.mrf.mxu0
    %v1970 = vadd.f32 0.0, %v1969
    %v1971 = vpop.f32.mrf.mxu0
    %v1972 = vpop.f32.mrf.mxu0
    %v1973 = vadd.f32 0.0, %v1972
    %v1974 = vpop.f32.mrf.mxu0
    %1975 = vmatprep.mubr.bf16.mxu0 0
    %1976 = vmatmul.mubr.bf16.gmra.mxu0 %v544
    %v1977 = vpop.f32.mrf.mxu0
    %v1978 = vadd.f32 0.0, %v1977
    %v1979 = vpop.f32.mrf.mxu0
    %v1980 = vpop.f32.mrf.mxu0
    %v1981 = vadd.f32 0.0, %v1980
    %v1982 = vpop.f32.mrf.mxu0
    %1983 = vdwg.mxu0
    %1984 = vmatprep.subr.bf16.mxu0 0
    %1985 = vmatpush1.bf16.msra.mxu0 %v1885
    %1986 = vmatprep.subr.bf16.mxu0 0
    %1987 = vmatpush1.bf16.msra.mxu0 %v1883
    %1988 = vmatprep.subr.bf16.mxu0 0
    %1989 = vmatpush1.bf16.msra.mxu0 %v1881
    %1990 = vmatprep.subr.bf16.mxu0 0
    %1991 = vmatpush1.bf16.msra.mxu0 %v1879
    %1992 = vmatprep.subr.bf16.mxu0 0
    %1993 = vmatpush1.bf16.msra.mxu0 %v1877
    %1994 = vmatprep.subr.bf16.mxu0 0
    %1995 = vmatpush1.bf16.msra.mxu0 %v1875
    %1996 = vmatprep.subr.bf16.mxu0 0
    %1997 = vmatpush1.bf16.msra.mxu0 %v1873
    %1998 = vmatprep.subr.bf16.mxu0 0
    %1999 = vmatpush1.bf16.msra.mxu0 %v1871
    %2000 = vmatprep.subr.bf16.mxu0 0
    %2001 = vmatpush2.bf16.msra.mxu0 0
    %2002 = vmatprep.subr.bf16.mxu0 0
    %2003 = vmatpush2.bf16.msra.mxu0 0
    %2004 = vmatprep.subr.bf16.mxu0 0
    %2005 = vmatpush2.bf16.msra.mxu0 0
    %2006 = vmatprep.subr.bf16.mxu0 0
    %2007 = vmatpush2.bf16.msra.mxu0 0
    %2008 = vmatprep.subr.bf16.mxu0 0
    %2009 = vmatpush2.bf16.msra.mxu0 0
    %2010 = vmatprep.subr.bf16.mxu0 0
    %2011 = vmatpush2.bf16.msra.mxu0 0
    %2012 = vmatprep.subr.bf16.mxu0 0
    %2013 = vmatpush2.bf16.msra.mxu0 0
    %2014 = vmatprep.subr.bf16.mxu0 0
    %2015 = vmatpush2.bf16.msra.mxu0 0
    %2016 = vmatprep.mubr.bf16.mxu0 0
    %2017 = vmatmul.mubr.bf16.gmra.mxu0 %v682
    %v2018 = vpop.f32.mrf.mxu0
    %v2019 = vadd.f32 %v1922, %v2018
    %v2020 = vpop.f32.mrf.mxu0
    %v2021 = vpop.f32.mrf.mxu0
    %v2022 = vadd.f32 %v1925, %v2021
    %v2023 = vpop.f32.mrf.mxu0
    %2024 = vmatprep.mubr.bf16.mxu0 0
    %2025 = vmatmul.mubr.bf16.gmra.mxu0 %v683
    %v2026 = vpop.f32.mrf.mxu0
    %v2027 = vadd.f32 %v1930, %v2026
    %v2028 = vpop.f32.mrf.mxu0
    %v2029 = vpop.f32.mrf.mxu0
    %v2030 = vadd.f32 %v1933, %v2029
    %v2031 = vpop.f32.mrf.mxu0
    %2032 = vmatprep.mubr.bf16.mxu0 0
    %2033 = vmatmul.mubr.bf16.gmra.mxu0 %v684
    %v2034 = vpop.f32.mrf.mxu0
    %v2035 = vadd.f32 %v1938, %v2034
    %v2036 = vpop.f32.mrf.mxu0
    %v2037 = vpop.f32.mrf.mxu0
    %v2038 = vadd.f32 %v1941, %v2037
    %v2039 = vpop.f32.mrf.mxu0
    %2040 = vmatprep.mubr.bf16.mxu0 0
    %2041 = vmatmul.mubr.bf16.gmra.mxu0 %v685
    %v2042 = vpop.f32.mrf.mxu0
    %v2043 = vadd.f32 %v1946, %v2042
    %v2044 = vpop.f32.mrf.mxu0
    %v2045 = vpop.f32.mrf.mxu0
    %v2046 = vadd.f32 %v1949, %v2045
    %v2047 = vpop.f32.mrf.mxu0
    %2048 = vmatprep.mubr.bf16.mxu0 0
    %2049 = vmatmul.mubr.bf16.gmra.mxu0 %v686
    %v2050 = vpop.f32.mrf.mxu0
    %v2051 = vadd.f32 %v1954, %v2050
    %v2052 = vpop.f32.mrf.mxu0
    %v2053 = vpop.f32.mrf.mxu0
    %v2054 = vadd.f32 %v1957, %v2053
    %v2055 = vpop.f32.mrf.mxu0
    %2056 = vmatprep.mubr.bf16.mxu0 0
    %2057 = vmatmul.mubr.bf16.gmra.mxu0 %v687
    %v2058 = vpop.f32.mrf.mxu0
    %v2059 = vadd.f32 %v1962, %v2058
    %v2060 = vpop.f32.mrf.mxu0
    %v2061 = vpop.f32.mrf.mxu0
    %v2062 = vadd.f32 %v1965, %v2061
    %v2063 = vpop.f32.mrf.mxu0
    %2064 = vmatprep.mubr.bf16.mxu0 0
    %2065 = vmatmul.mubr.bf16.gmra.mxu0 %v688
    %v2066 = vpop.f32.mrf.mxu0
    %v2067 = vadd.f32 %v1970, %v2066
    %v2068 = vpop.f32.mrf.mxu0
    %v2069 = vpop.f32.mrf.mxu0
    %v2070 = vadd.f32 %v1973, %v2069
    %v2071 = vpop.f32.mrf.mxu0
    %2072 = vmatprep.mubr.bf16.mxu0 0
    %2073 = vmatmul.mubr.bf16.gmra.mxu0 %v689
    %v2074 = vpop.f32.mrf.mxu0
    %v2075 = vadd.f32 %v1978, %v2074
    %v2076 = vpop.f32.mrf.mxu0
    %v2077 = vpop.f32.mrf.mxu0
    %v2078 = vadd.f32 %v1981, %v2077
    %v2079 = vpop.f32.mrf.mxu0
    %2080 = vdwg.mxu0
    %v2081 = vld [vmem:[#allocation16] sm:$0xf]
    %v2082 = vld [vmem:[#allocation16 + $0x4] sm:$0xf]
    %v2083 = vld [vmem:[#allocation16 + $0x8] sm:$0xf]
    %v2084 = vld [vmem:[#allocation16 + $0xc] sm:$0xf]
    %v2085 = vld [vmem:[#allocation16 + $0x10] sm:$0xf]
    %v2086 = vld [vmem:[#allocation16 + $0x14] sm:$0xf]
    %v2087 = vld [vmem:[#allocation16 + $0x18] sm:$0xf]
    %v2088 = vld [vmem:[#allocation16 + $0x1c] sm:$0xf]
    %v2089 = vld [vmem:[#allocation16 + $0x20] sm:$0xf]
    %v2090 = vld [vmem:[#allocation16 + $0x24] sm:$0xf]
    %v2091 = vld [vmem:[#allocation16 + $0x28] sm:$0xf]
    %v2092 = vld [vmem:[#allocation16 + $0x2c] sm:$0xf]
    %v2093 = vld [vmem:[#allocation16 + $0x30] sm:$0xf]
    %v2094 = vld [vmem:[#allocation16 + $0x34] sm:$0xf]
    %v2095 = vld [vmem:[#allocation16 + $0x38] sm:$0xf]
    %v2096 = vld [vmem:[#allocation16 + $0x3c] sm:$0xf]
    %v2113 = vunpack.c.l.b16 %v2081
    %v2114 = vunpack.c.l.b16 %v2082
    %v2115 = vunpack.c.l.b16 %v2083
    %v2116 = vunpack.c.l.b16 %v2084
    %v2117 = vunpack.c.l.b16 %v2085
    %v2118 = vunpack.c.l.b16 %v2086
    %v2119 = vunpack.c.l.b16 %v2087
    %v2120 = vunpack.c.l.b16 %v2088
    %v2121 = vunpack.c.l.b16 %v2089
    %v2122 = vunpack.c.l.b16 %v2090
    %v2123 = vunpack.c.l.b16 %v2091
    %v2124 = vunpack.c.l.b16 %v2092
    %v2125 = vunpack.c.l.b16 %v2093
    %v2126 = vunpack.c.l.b16 %v2094
    %v2127 = vunpack.c.l.b16 %v2095
    %v2128 = vunpack.c.l.b16 %v2096
    %v2129 = vpack.c.b16 %v2114, %v2113
    %v2130 = vpack.c.b16 %v2116, %v2115
    %v2131 = vpack.c.b16 %v2118, %v2117
    %v2132 = vpack.c.b16 %v2120, %v2119
    %v2133 = vpack.c.b16 %v2122, %v2121
    %v2134 = vpack.c.b16 %v2124, %v2123
    %v2135 = vpack.c.b16 %v2126, %v2125
    %v2136 = vpack.c.b16 %v2128, %v2127
    %2145 = vmatprep.subr.bf16.mxu0 0
    %2146 = vmatpush1.bf16.msra.mxu0 %v2136
    %2147 = vmatprep.subr.bf16.mxu0 0
    %2148 = vmatpush1.bf16.msra.mxu0 %v2135
    %2149 = vmatprep.subr.bf16.mxu0 0
    %2150 = vmatpush1.bf16.msra.mxu0 %v2134
    %2151 = vmatprep.subr.bf16.mxu0 0
    %2152 = vmatpush1.bf16.msra.mxu0 %v2133
    %2153 = vmatprep.subr.bf16.mxu0 0
    %2154 = vmatpush1.bf16.msra.mxu0 %v2132
    %2155 = vmatprep.subr.bf16.mxu0 0
    %2156 = vmatpush1.bf16.msra.mxu0 %v2131
    %2157 = vmatprep.subr.bf16.mxu0 0
    %2158 = vmatpush1.bf16.msra.mxu0 %v2130
    %2159 = vmatprep.subr.bf16.mxu0 0
    %2160 = vmatpush1.bf16.msra.mxu0 %v2129
    %2161 = vmatprep.subr.bf16.mxu0 0
    %2162 = vmatpush2.bf16.msra.mxu0 0
    %2163 = vmatprep.subr.bf16.mxu0 0
    %2164 = vmatpush2.bf16.msra.mxu0 0
    %2165 = vmatprep.subr.bf16.mxu0 0
    %2166 = vmatpush2.bf16.msra.mxu0 0
    %2167 = vmatprep.subr.bf16.mxu0 0
    %2168 = vmatpush2.bf16.msra.mxu0 0
    %2169 = vmatprep.subr.bf16.mxu0 0
    %2170 = vmatpush2.bf16.msra.mxu0 0
    %2171 = vmatprep.subr.bf16.mxu0 0
    %2172 = vmatpush2.bf16.msra.mxu0 0
    %2173 = vmatprep.subr.bf16.mxu0 0
    %2174 = vmatpush2.bf16.msra.mxu0 0
    %2175 = vmatprep.subr.bf16.mxu0 0
    %2176 = vmatpush2.bf16.msra.mxu0 0
    %2177 = vmatprep.mubr.bf16.mxu0 0
    %2178 = vmatmul.mubr.bf16.gmra.mxu0 %v1654
    %v2179 = vpop.f32.mrf.mxu0
    %v2180 = vadd.f32 0.0, %v2179
    %v2181 = vpop.f32.mrf.mxu0
    %v2182 = vpop.f32.mrf.mxu0
    %v2183 = vadd.f32 0.0, %v2182
    %v2184 = vpop.f32.mrf.mxu0
    %2185 = vmatprep.mubr.bf16.mxu0 0
    %2186 = vmatmul.mubr.bf16.gmra.mxu0 %v1655
    %v2187 = vpop.f32.mrf.mxu0
    %v2188 = vadd.f32 0.0, %v2187
    %v2189 = vpop.f32.mrf.mxu0
    %v2190 = vpop.f32.mrf.mxu0
    %v2191 = vadd.f32 0.0, %v2190
    %v2192 = vpop.f32.mrf.mxu0
    %2193 = vmatprep.mubr.bf16.mxu0 0
    %2194 = vmatmul.mubr.bf16.gmra.mxu0 %v1656
    %v2195 = vpop.f32.mrf.mxu0
    %v2196 = vadd.f32 0.0, %v2195
    %v2197 = vpop.f32.mrf.mxu0
    %v2198 = vpop.f32.mrf.mxu0
    %v2199 = vadd.f32 0.0, %v2198
    %v2200 = vpop.f32.mrf.mxu0
    %2201 = vmatprep.mubr.bf16.mxu0 0
    %2202 = vmatmul.mubr.bf16.gmra.mxu0 %v1657
    %v2203 = vpop.f32.mrf.mxu0
    %v2204 = vadd.f32 0.0, %v2203
    %v2205 = vpop.f32.mrf.mxu0
    %v2206 = vpop.f32.mrf.mxu0
    %v2207 = vadd.f32 0.0, %v2206
    %v2208 = vpop.f32.mrf.mxu0
    %2209 = vmatprep.mubr.bf16.mxu0 0
    %2210 = vmatmul.mubr.bf16.gmra.mxu0 %v1658
    %v2211 = vpop.f32.mrf.mxu0
    %v2212 = vadd.f32 0.0, %v2211
    %v2213 = vpop.f32.mrf.mxu0
    %v2214 = vpop.f32.mrf.mxu0
    %v2215 = vadd.f32 0.0, %v2214
    %v2216 = vpop.f32.mrf.mxu0
    %2217 = vmatprep.mubr.bf16.mxu0 0
    %2218 = vmatmul.mubr.bf16.gmra.mxu0 %v1659
    %v2219 = vpop.f32.mrf.mxu0
    %v2220 = vadd.f32 0.0, %v2219
    %v2221 = vpop.f32.mrf.mxu0
    %v2222 = vpop.f32.mrf.mxu0
    %v2223 = vadd.f32 0.0, %v2222
    %v2224 = vpop.f32.mrf.mxu0
    %2225 = vmatprep.mubr.bf16.mxu0 0
    %2226 = vmatmul.mubr.bf16.gmra.mxu0 %v1660
    %v2227 = vpop.f32.mrf.mxu0
    %v2228 = vadd.f32 0.0, %v2227
    %v2229 = vpop.f32.mrf.mxu0
    %v2230 = vpop.f32.mrf.mxu0
    %v2231 = vadd.f32 0.0, %v2230
    %v2232 = vpop.f32.mrf.mxu0
    %2233 = vmatprep.mubr.bf16.mxu0 0
    %2234 = vmatmul.mubr.bf16.gmra.mxu0 %v1661
    %v2235 = vpop.f32.mrf.mxu0
    %v2236 = vadd.f32 0.0, %v2235
    %v2237 = vpop.f32.mrf.mxu0
    %v2238 = vpop.f32.mrf.mxu0
    %v2239 = vadd.f32 0.0, %v2238
    %v2240 = vpop.f32.mrf.mxu0
    %2241 = vdwg.mxu0
    %v2242 = vadd.f32 %v2019, %v2180
    %v2243 = vadd.f32 %v2022, %v2183
    %v2244 = vadd.f32 %v2027, %v2188
    %v2245 = vadd.f32 %v2030, %v2191
    %v2246 = vadd.f32 %v2035, %v2196
    %v2247 = vadd.f32 %v2038, %v2199
    %v2248 = vadd.f32 %v2043, %v2204
    %v2249 = vadd.f32 %v2046, %v2207
    %v2250 = vadd.f32 %v2051, %v2212
    %v2251 = vadd.f32 %v2054, %v2215
    %v2252 = vadd.f32 %v2059, %v2220
    %v2253 = vadd.f32 %v2062, %v2223
    %v2254 = vadd.f32 %v2067, %v2228
    %v2255 = vadd.f32 %v2070, %v2231
    %v2256 = vadd.f32 %v2075, %v2236
    %v2257 = vadd.f32 %v2078, %v2239
    %v2258 = vld [vmem:[%s11] sm:$0x1]
    %v2260 = vlaneseq
    %v2261 = vshrl.u32 %v2260, 7
    %v2262 = vsub.s32 0, %v2261
    %v2263 = vrot.slane %v2258, %v2262
    %v2265 = vadd.f32 %v2242, %v2263
    %v2266 = vadd.f32 %v2243, %v2263
    %v2267 = vadd.f32 %v2244, %v2263
    %v2268 = vadd.f32 %v2245, %v2263
    %v2269 = vadd.f32 %v2246, %v2263
    %v2270 = vadd.f32 %v2247, %v2263
    %v2271 = vadd.f32 %v2248, %v2263
    %v2272 = vadd.f32 %v2249, %v2263
    %v2273 = vadd.f32 %v2250, %v2263
    %v2274 = vadd.f32 %v2251, %v2263
    %v2275 = vadd.f32 %v2252, %v2263
    %v2276 = vadd.f32 %v2253, %v2263
    %v2277 = vadd.f32 %v2254, %v2263
    %v2278 = vadd.f32 %v2255, %v2263
    %v2279 = vadd.f32 %v2256, %v2263
    %v2280 = vadd.f32 %v2257, %v2263
    %v2281 = vmax.f32 %v2265, 0.0
    %v2282 = vmax.f32 %v2266, 0.0
    %v2283 = vmax.f32 %v2267, 0.0
    %v2284 = vmax.f32 %v2268, 0.0
    %v2285 = vmax.f32 %v2269, 0.0
    %v2286 = vmax.f32 %v2270, 0.0
    %v2287 = vmax.f32 %v2271, 0.0
    %v2288 = vmax.f32 %v2272, 0.0
    %v2289 = vmax.f32 %v2273, 0.0
    %v2290 = vmax.f32 %v2274, 0.0
    %v2291 = vmax.f32 %v2275, 0.0
    %v2292 = vmax.f32 %v2276, 0.0
    %v2293 = vmax.f32 %v2277, 0.0
    %v2294 = vmax.f32 %v2278, 0.0
    %v2295 = vmax.f32 %v2279, 0.0
    %v2296 = vmax.f32 %v2280, 0.0
    %v2297 = vpack.c.bf16 %v2282, %v2281
    %v2298 = vpack.c.bf16 %v2284, %v2283
    %v2299 = vpack.c.bf16 %v2286, %v2285
    %v2300 = vpack.c.bf16 %v2288, %v2287
    %v2301 = vpack.c.bf16 %v2290, %v2289
    %v2302 = vpack.c.bf16 %v2292, %v2291
    %v2303 = vpack.c.bf16 %v2294, %v2293
    %v2304 = vpack.c.bf16 %v2296, %v2295
    %v2305 = vld [vmem:[#allocation7] sm:$0xf]
    %2306 = vmatprep.subr.bf16.mxu0 0
    %2307 = vmatpush1.bf16.msra.mxu0 %v2304
    %2308 = vmatprep.subr.bf16.mxu0 0
    %2309 = vmatpush1.bf16.msra.mxu0 %v2303
    %2310 = vmatprep.subr.bf16.mxu0 0
    %2311 = vmatpush1.bf16.msra.mxu0 %v2302
    %2312 = vmatprep.subr.bf16.mxu0 0
    %2313 = vmatpush1.bf16.msra.mxu0 %v2301
    %2314 = vmatprep.subr.bf16.mxu0 0
    %2315 = vmatpush1.bf16.msra.mxu0 %v2300
    %2316 = vmatprep.subr.bf16.mxu0 0
    %2317 = vmatpush1.bf16.msra.mxu0 %v2299
    %2318 = vmatprep.subr.bf16.mxu0 0
    %2319 = vmatpush1.bf16.msra.mxu0 %v2298
    %2320 = vmatprep.subr.bf16.mxu0 0
    %2321 = vmatpush1.bf16.msra.mxu0 %v2297
    %2322 = vmatprep.subr.bf16.mxu0 0
    %2323 = vmatpush2.bf16.msra.mxu0 0
    %2324 = vmatprep.subr.bf16.mxu0 0
    %2325 = vmatpush2.bf16.msra.mxu0 0
    %2326 = vmatprep.subr.bf16.mxu0 0
    %2327 = vmatpush2.bf16.msra.mxu0 0
    %2328 = vmatprep.subr.bf16.mxu0 0
    %2329 = vmatpush2.bf16.msra.mxu0 0
    %2330 = vmatprep.subr.bf16.mxu0 0
    %2331 = vmatpush2.bf16.msra.mxu0 0
    %2332 = vmatprep.subr.bf16.mxu0 0
    %2333 = vmatpush2.bf16.msra.mxu0 0
    %2334 = vmatprep.subr.bf16.mxu0 0
    %2335 = vmatpush2.bf16.msra.mxu0 0
    %2336 = vmatprep.subr.bf16.mxu0 0
    %2337 = vmatpush2.bf16.msra.mxu0 0
    %2338 = vmatprep.mubr.bf16.mxu0 0
    %2339 = vmatmul.mubr.bf16.gmra.mxu0 %v2305
    %v2340 = vpop.f32.mrf.mxu0
    %v2341 = vadd.f32 0.0, %v2340
    %v2342 = vpop.f32.mrf.mxu0
    %v2343 = vpop.f32.mrf.mxu0
    %v2344 = vpop.f32.mrf.mxu0
    %2345 = vdwg.mxu0
    %v2346 = vld [vmem:[#allocation17] sm:$0xff]
    %v2347 = vld [vmem:[#allocation17 + $0x8] sm:$0xff]
    %v2348 = vld [vmem:[#allocation17 + $0x10] sm:$0xff]
    %v2349 = vld [vmem:[#allocation17 + $0x18] sm:$0xff]
    %v2350 = vld [vmem:[#allocation17 + $0x20] sm:$0xff]
    %v2351 = vld [vmem:[#allocation17 + $0x28] sm:$0xff]
    %v2352 = vld [vmem:[#allocation17 + $0x30] sm:$0xff]
    %v2353 = vld [vmem:[#allocation17 + $0x38] sm:$0xff]
    %v2354 = vld [vmem:[#allocation17 + $0x40] sm:$0xff]
    %v2355 = vld [vmem:[#allocation17 + $0x48] sm:$0xff]
    %v2356 = vld [vmem:[#allocation17 + $0x50] sm:$0xff]
    %v2357 = vld [vmem:[#allocation17 + $0x58] sm:$0xff]
    %v2358 = vld [vmem:[#allocation17 + $0x60] sm:$0xff]
    %v2359 = vld [vmem:[#allocation17 + $0x68] sm:$0xff]
    %v2360 = vld [vmem:[#allocation17 + $0x70] sm:$0xff]
    %v2361 = vld [vmem:[#allocation17 + $0x78] sm:$0xff]
    %v2362 = vld [vmem:[%s13] sm:$0x1]
    %v2364 = vlaneseq
    %v2365 = vshrl.u32 %v2364, 7
    %v2366 = vsub.s32 0, %v2365
    %v2367 = vrot.slane %v2362, %v2366
    %2369 = vmatprep.subr.mxu0 0.0
    %2370 = vmatpush1.msra.mxu0 %v2361
    %2371 = vmatprep.subr.mxu0 0.0
    %2372 = vmatpush1.msra.mxu0 %v2360
    %2373 = vmatprep.subr.mxu0 0.0
    %2374 = vmatpush1.msra.mxu0 %v2359
    %2375 = vmatprep.subr.mxu0 0.0
    %2376 = vmatpush1.msra.mxu0 %v2358
    %2377 = vmatprep.subr.mxu0 0.0
    %2378 = vmatpush1.msra.mxu0 %v2357
    %2379 = vmatprep.subr.mxu0 0.0
    %2380 = vmatpush1.msra.mxu0 %v2356
    %2381 = vmatprep.subr.mxu0 0.0
    %2382 = vmatpush1.msra.mxu0 %v2355
    %2383 = vmatprep.subr.mxu0 0.0
    %2384 = vmatpush1.msra.mxu0 %v2354
    %2385 = vmatprep.subr.mxu0 0.0
    %2386 = vmatpush1.msra.mxu0 %v2353
    %2387 = vmatprep.subr.mxu0 0.0
    %2388 = vmatpush1.msra.mxu0 %v2352
    %2389 = vmatprep.subr.mxu0 0.0
    %2390 = vmatpush1.msra.mxu0 %v2351
    %2391 = vmatprep.subr.mxu0 0.0
    %2392 = vmatpush1.msra.mxu0 %v2350
    %2393 = vmatprep.subr.mxu0 0.0
    %2394 = vmatpush1.msra.mxu0 %v2349
    %2395 = vmatprep.subr.mxu0 0.0
    %2396 = vmatpush1.msra.mxu0 %v2348
    %2397 = vmatprep.subr.mxu0 0.0
    %2398 = vmatpush1.msra.mxu0 %v2347
    %2399 = vmatprep.subr.mxu0 0.0
    %2400 = vmatpush1.msra.mxu0 %v2346
    %2401 = vmatprep.subr.mxu0 0.0
    %2402 = vmatpush2.msra.mxu0 0.0
    %2403 = vmatprep.subr.mxu0 0.0
    %2404 = vmatpush2.msra.mxu0 0.0
    %2405 = vmatprep.subr.mxu0 0.0
    %2406 = vmatpush2.msra.mxu0 0.0
    %2407 = vmatprep.subr.mxu0 0.0
    %2408 = vmatpush2.msra.mxu0 0.0
    %2409 = vmatprep.subr.mxu0 0.0
    %2410 = vmatpush2.msra.mxu0 0.0
    %2411 = vmatprep.subr.mxu0 0.0
    %2412 = vmatpush2.msra.mxu0 0.0
    %2413 = vmatprep.subr.mxu0 0.0
    %2414 = vmatpush2.msra.mxu0 0.0
    %2415 = vmatprep.subr.mxu0 0.0
    %2416 = vmatpush2.msra.mxu0 0.0
    %2417 = vmatprep.subr.mxu0 0.0
    %2418 = vmatpush2.msra.mxu0 0.0
    %2419 = vmatprep.subr.mxu0 0.0
    %2420 = vmatpush2.msra.mxu0 0.0
    %2421 = vmatprep.subr.mxu0 0.0
    %2422 = vmatpush2.msra.mxu0 0.0
    %2423 = vmatprep.subr.mxu0 0.0
    %2424 = vmatpush2.msra.mxu0 0.0
    %2425 = vmatprep.subr.mxu0 0.0
    %2426 = vmatpush2.msra.mxu0 0.0
    %2427 = vmatprep.subr.mxu0 0.0
    %2428 = vmatpush2.msra.mxu0 0.0
    %2429 = vmatprep.subr.mxu0 0.0
    %2430 = vmatpush2.msra.mxu0 0.0
    %2431 = vmatprep.subr.mxu0 0.0
    %2432 = vmatpush2.msra.mxu0 0.0
    %2433 = vmatprep.mubr.f32.mxu0 0.0
    %2434 = vmatmul.mubr.f32.gmra.mxu0 %v2341
    %v2435 = vpop.f32.mrf.mxu0
    %v2436 = vadd.f32 %v2367, %v2435
    %v2437 = vpop.f32.mrf.mxu0
    %2438 = vdwg.mxu0
    %2439 = vst [vmem:[#allocation19] sm:$0xff] %v2436
    // Predicated region
    $region98: #{tpu_custom_call.1} parent=1 // pred_check
      _
    $region99: #{tpu_custom_call.1} parent=1 // pred_check_branch
      %2441 = sbr.rel (0) target = $region101
    $region100: #{tpu_custom_call.1} parent=1 // pred_region
      %s2443 = ssub.s32 128, 128
      %2444 = vsyncadd [#allocation4], %s2443
      %s2446 = sshll.u32 [#allocation19], 4
      %s2447 = int_to_ptr.vmem [resolvable:$true] %s2446
      %2449 = dma.vmem_to_hbm [thread:$0]  %s2447, 128, %s14, [#allocation4]
    $region101: #{tpu_custom_call.1} parent=1 // pred_fallthru
      _
    // Predicated region
    $region102: #{tpu_custom_call.1} parent=1 // pred_check
      _
    $region103: #{tpu_custom_call.1} parent=1 // pred_check_branch
      %2451 = sbr.rel (0) target = $region105
    $region104: #{tpu_custom_call.1} parent=1 // pred_region
      %2452 = dma.done [#allocation4], 128
    $region105: #{tpu_custom_call.1} parent=1 // pred_fallthru
      _
    %2453 = vsyncpa [#allocation3], 1
    %2454 = vsyncpa [#allocation6], 1
    %2455 = vsyncpa [#allocation9], 1
    %2456 = vsyncpa [#allocation12], 1
    %2457 = vsyncpa [#allocation15], 1
    %2458 = vsyncpa [#allocation18], 1
    %2459 = vsyncpa [#allocation4], 1

</llo_original>
